<compile_context>
chip_gen: v5e
topology: v5e:2x2
jax: 0.10.0
libtpu: 0.0.40
codegen_flags: <defaults>
</compile_context>

<pallas_src>
import functools

import jax
import jax.numpy as jnp
from jax.experimental import pallas as pl
from jax.experimental.pallas import tpu as pltpu


def _round_up(x: int, m: int) -> int:
    return (x + m - 1) // m * m


def _vmem_limit(resident_bytes: int) -> int:
    # Generous headroom, capped below the smallest physical VMEM (v7x: 64 MiB).
    return int(min(56 * 2**20, max(16 * 2**20, 2 * resident_bytes + (4 << 20))))


# ----------------------------------------------------------------------------
# Kernel 1: single-timestep 3-layer LSTM, everything resident in VMEM.
# ----------------------------------------------------------------------------
def _lstm_cells_kernel(x_ref, h_ref, c_ref,
                       w0_ref, w1_ref, w2_ref,
                       b0_ref, b1_ref, b2_ref,
                       hout_ref, cout_ref):
    def cell(xh, c, w_ref, b_ref):
        # Fused gate matmul: xh = concat([x, h]) bf16, w = [W_ih; W_hh] bf16.
        gates = jnp.dot(xh, w_ref[...],
                        preferred_element_type=jnp.float32) + b_ref[...]
        hp = c.shape[-1]
        i_g = jax.nn.sigmoid(gates[:, 0 * hp:1 * hp])
        f_g = jax.nn.sigmoid(gates[:, 1 * hp:2 * hp])
        g_g = jnp.tanh(gates[:, 2 * hp:3 * hp])
        o_g = jax.nn.sigmoid(gates[:, 3 * hp:4 * hp])
        c_new = f_g * c + i_g * g_g
        h_new = o_g * jnp.tanh(c_new)
        return h_new, c_new

    x = x_ref[...]                                            # (Bp, Ep) bf16

    h0, c0 = cell(jnp.concatenate([x, h_ref[0].astype(jnp.bfloat16)], axis=-1),
                  c_ref[0], w0_ref, b0_ref)
    h1, c1 = cell(jnp.concatenate([h0.astype(jnp.bfloat16),
                                   h_ref[1].astype(jnp.bfloat16)], axis=-1),
                  c_ref[1], w1_ref, b1_ref)
    h2, c2 = cell(jnp.concatenate([h1.astype(jnp.bfloat16),
                                   h_ref[2].astype(jnp.bfloat16)], axis=-1),
                  c_ref[2], w2_ref, b2_ref)

    hout_ref[0] = h0
    hout_ref[1] = h1
    hout_ref[2] = h2
    cout_ref[0] = c0
    cout_ref[1] = c1
    cout_ref[2] = c2


# ----------------------------------------------------------------------------
# Kernel 2: vocab projection, tiled over V (streams bf16 lin_w tiles).
# ----------------------------------------------------------------------------
def _vocab_proj_kernel(h2_ref, w_ref, b_ref, logits_ref):
    logits_ref[...] = (jnp.dot(h2_ref[...], w_ref[...],
                               preferred_element_type=jnp.float32)
                       + b_ref[...])


# ----------------------------------------------------------------------------
# Parameters
# ----------------------------------------------------------------------------
def init_raw_params(key, voc_size, embed_size, hidden_size):
    """Deterministic synthetic parameters in the torch module's native layout."""
    V, E, H = voc_size, embed_size, hidden_size
    ks = iter(jax.random.split(key, 20))
    s = 0.1
    raw = {
        "embed": jax.random.normal(next(ks), (V, E), jnp.float32) * s,
        "lin_w": jax.random.normal(next(ks), (V, H), jnp.float32) * s,
        "lin_b": jax.random.normal(next(ks), (V,), jnp.float32) * s,
    }
    for l in range(3):
        in_dim = E if l == 0 else H
        raw[f"w_ih_l{l}"] = jax.random.normal(next(ks), (4 * H, in_dim), jnp.float32) * s
        raw[f"w_hh_l{l}"] = jax.random.normal(next(ks), (4 * H, H), jnp.float32) * s
        raw[f"b_ih_l{l}"] = jax.random.normal(next(ks), (4 * H,), jnp.float32) * s
        raw[f"b_hh_l{l}"] = jax.random.normal(next(ks), (4 * H,), jnp.float32) * s
    return raw


def pack_params(raw, voc_size, embed_size, hidden_size):
    """Pad / transpose / fuse torch-layout params into the kernel layout.

      per-layer fused gate weight : bf16 (in_p + Hp, 4*Hp), gate k at cols [k*Hp, k*Hp+H)
      per-layer combined bias     : f32  (1, 4*Hp)   (b_ih + b_hh)
      linear head                 : bf16 (Hp, Vp),  f32 (1, Vp)
      embedding table             : f32  (V, Ep)    (gather stays in plain JAX)

    Padded regions are zero, so they add nothing to the dots and the padded
    h/c columns stay exactly zero across steps.
    """
    V, E, H = voc_size, embed_size, hidden_size
    Ep, Hp, Vp = _round_up(E, 128), _round_up(H, 128), _round_up(V, 128)

    def pad_gate_w(w_t, in_dim, in_p):              # w_t: (in_dim, 4H)
        out = jnp.zeros((in_p, 4 * Hp), jnp.float32)
        for k in range(4):
            out = out.at[:in_dim, k * Hp:k * Hp + H].set(w_t[:, k * H:(k + 1) * H])
        return out

    def pad_gate_b(b):                              # b: (4H,)
        out = jnp.zeros((1, 4 * Hp), jnp.float32)
        for k in range(4):
            out = out.at[0, k * Hp:k * Hp + H].set(b[k * H:(k + 1) * H])
        return out

    packed = {}
    for l in range(3):
        in_dim, in_p = (E, Ep) if l == 0 else (H, Hp)
        w_cat = jnp.concatenate(
            [pad_gate_w(raw[f"w_ih_l{l}"].T, in_dim, in_p),
             pad_gate_w(raw[f"w_hh_l{l}"].T, H, Hp)], axis=0)
        packed[f"w{l}"] = w_cat.astype(jnp.bfloat16)
        packed[f"b{l}"] = pad_gate_b(raw[f"b_ih_l{l}"] + raw[f"b_hh_l{l}"])

    packed["lin_w"] = (jnp.zeros((Hp, Vp), jnp.float32)
                       .at[:H, :V].set(raw["lin_w"].T)).astype(jnp.bfloat16)
    packed["lin_b"] = jnp.zeros((1, Vp), jnp.float32).at[0, :V].set(raw["lin_b"])
    packed["embed"] = jnp.zeros((V, Ep), jnp.float32).at[:, :E].set(raw["embed"])
    return packed


# ----------------------------------------------------------------------------
# Forward
# ----------------------------------------------------------------------------
@functools.partial(jax.jit, static_argnames=("voc_size", "embed_size", "hidden_size"))
def generator_forward(tokens, h, c, packed, *, voc_size, embed_size, hidden_size):
    """Equivalent of Generator.forward(input, (h, c)) -> (logits, (h_out, c_out)).

    tokens : int32 (B,)    h, c : float32 (3, B, H)
    """
    V, E, H = voc_size, embed_size, hidden_size
    B = tokens.shape[0]
    Bp = _round_up(B, 8)                    # f32 sublane multiple -> unmasked stores
    Ep = packed["embed"].shape[1]
    Hp = packed["b0"].shape[1] // 4
    Vp = packed["lin_w"].shape[1]

    # --- glue: embedding gather. NOTE: jnp.take clamps OOB ids; torch raises. ---
    x = jnp.take(packed["embed"], tokens, axis=0).astype(jnp.bfloat16)    # (B, Ep)
    x = jnp.zeros((Bp, Ep), jnp.bfloat16).at[:B].set(x)
    h_p = jnp.zeros((3, Bp, Hp), jnp.float32).at[:, :B, :H].set(h)
    c_p = jnp.zeros((3, Bp, Hp), jnp.float32).at[:, :B, :H].set(c)

    vmem = pl.BlockSpec(memory_space=pltpu.MemorySpace.VMEM)

    lstm_ins = (x, h_p, c_p, packed["w0"], packed["w1"], packed["w2"],
                packed["b0"], packed["b1"], packed["b2"])
    lstm_bytes = sum(int(a.size) * a.dtype.itemsize for a in lstm_ins) \
        + 2 * 3 * Bp * Hp * 4
    lstm_cost = pl.CostEstimate(
        flops=int(2 * Bp * 4 * Hp * ((Ep + Hp) + 2 * (2 * Hp))),
        transcendentals=int(5 * 3 * Bp * Hp),
        bytes_accessed=int(lstm_bytes))

    # TODO(synk): in the decode loops (likelihood/sample/evolve) keep the LSTM
    # weights resident across steps (cross-call prefetch / input_output_aliases)
    # instead of re-DMAing them HBM->VMEM on every generated token.
    h_out, c_out = pl.pallas_call(
        _lstm_cells_kernel,
        out_shape=(jax.ShapeDtypeStruct((3, Bp, Hp), jnp.float32),
                   jax.ShapeDtypeStruct((3, Bp, Hp), jnp.float32)),
        in_specs=[vmem] * 9,
        out_specs=(vmem, vmem),
        cost_estimate=lstm_cost,
        compiler_params=pltpu.CompilerParams(
            vmem_limit_bytes=_vmem_limit(lstm_bytes)),
    )(*lstm_ins)

    # --- vocab projection: grid over V tiles, 'parallel' (megacore on v7x). ---
    h2 = h_out[2].astype(jnp.bfloat16)                      # (Bp, Hp)
    tile_v = 512 if Vp % 512 == 0 else 128
    grid_v = Vp // tile_v

    proj_bytes = Bp * Hp * 2 + Hp * Vp * 2 + Vp * 4 + Bp * Vp * 4
    proj_resident = Bp * Hp * 2 + 2 * (Hp * tile_v * 2 + tile_v * 4 + Bp * tile_v * 4)
    proj_cost = pl.CostEstimate(flops=int(2 * Bp * Hp * Vp),
                                transcendentals=0,
                                bytes_accessed=int(proj_bytes))

    logits_p = pl.pallas_call(
        _vocab_proj_kernel,
        out_shape=jax.ShapeDtypeStruct((Bp, Vp), jnp.float32),
        grid_spec=pltpu.PrefetchScalarGridSpec(
            num_scalar_prefetch=0,
            grid=(grid_v,),
            in_specs=[pl.BlockSpec((Bp, Hp), lambda j: (0, 0)),
                      pl.BlockSpec((Hp, tile_v), lambda j: (0, j)),
                      pl.BlockSpec((1, tile_v), lambda j: (0, j))],
            out_specs=pl.BlockSpec((Bp, tile_v), lambda j: (0, j))),
        cost_estimate=proj_cost,
        compiler_params=pltpu.CompilerParams(
            dimension_semantics=("parallel",),
            vmem_limit_bytes=_vmem_limit(proj_resident)),
    )(h2, packed["lin_w"], packed["lin_b"])

    logits = logits_p[:B, :V]
    return logits, (h_out[:, :B, :H], c_out[:, :B, :H])


# ----------------------------------------------------------------------------
# Pure-JAX reference (same bf16 weight/input rounding as the kernel)
# ----------------------------------------------------------------------------
def _reference_forward(tokens, h, c, raw):
    x = jnp.take(raw["embed"], tokens, axis=0)
    H = h.shape[-1]
    h_out, c_out = [], []
    inp = x
    for l in range(3):
        wih = raw[f"w_ih_l{l}"].astype(jnp.bfloat16).astype(jnp.float32)
        whh = raw[f"w_hh_l{l}"].astype(jnp.bfloat16).astype(jnp.float32)
        b = raw[f"b_ih_l{l}"] + raw[f"b_hh_l{l}"]
        xi = inp.astype(jnp.bfloat16).astype(jnp.float32)
        hi = h[l].astype(jnp.bfloat16).astype(jnp.float32)
        gates = xi @ wih.T + hi @ whh.T + b
        i_g = jax.nn.sigmoid(gates[:, 0 * H:1 * H])
        f_g = jax.nn.sigmoid(gates[:, 1 * H:2 * H])
        g_g = jnp.tanh(gates[:, 2 * H:3 * H])
        o_g = jax.nn.sigmoid(gates[:, 3 * H:4 * H])
        c_new = f_g * c[l] + i_g * g_g
        h_new = o_g * jnp.tanh(c_new)
        h_out.append(h_new)
        c_out.append(c_new)
        inp = h_new
    lw = raw["lin_w"].astype(jnp.bfloat16).astype(jnp.float32)
    h2 = inp.astype(jnp.bfloat16).astype(jnp.float32)
    logits = h2 @ lw.T + raw["lin_b"]
    return logits, (jnp.stack(h_out), jnp.stack(c_out))


if __name__ == "__main__":
    # Small shapes consistent with the module (real model: E=128, H=512, V=voc.size).
    B, V, E, H = 4, 24, 32, 64

    key = jax.random.PRNGKey(0)
    k_par, k_tok, k_h, k_c = jax.random.split(key, 4)

    raw = init_raw_params(k_par, V, E, H)
    packed = pack_params(raw, V, E, H)

    tokens = jax.random.randint(k_tok, (B,), 0, V, dtype=jnp.int32)   # input token ids
    h0 = jax.random.uniform(k_h, (3, B, H), jnp.float32)              # init_h -> h
    c0 = jax.random.uniform(k_c, (3, B, H), jnp.float32)              # init_h -> c

    logits, (h_out, c_out) = generator_forward(
        tokens, h0, c0, packed, voc_size=V, embed_size=E, hidden_size=H)
    jax.block_until_ready((logits, h_out, c_out))

    assert logits.shape == (B, V)
    assert h_out.shape == (3, B, H)
    assert c_out.shape == (3, B, H)

    ref_logits, (ref_h, ref_c) = _reference_forward(tokens, h0, c0, raw)
    assert jnp.allclose(logits, ref_logits, atol=5e-2, rtol=5e-2)
    assert jnp.allclose(h_out, ref_h, atol=5e-2, rtol=5e-2)
    assert jnp.allclose(c_out, ref_c, atol=5e-2, rtol=5e-2)

    print("KERNEL_OK")
</pallas_src>

<mosaic_0001>
module attributes {stable_mosaic.version = 11 : i64} {
  func.func @_vocab_proj_kernel(%arg0: i32, %arg1: memref<8x128xbf16, #tpu.memory_space<vmem>>, %arg2: memref<128x128xbf16, #tpu.memory_space<vmem>>, %arg3: memref<1x128xf32, #tpu.memory_space<vmem>>, %arg4: memref<8x128xf32, #tpu.memory_space<vmem>>) attributes {dimension_semantics = [#tpu.dimension_semantics<parallel>], iteration_bounds = array<i64: 1>, scalar_prefetch = 0 : i64, scratch_operands = 0 : i64, tpu.core_type = #tpu.core_type<tc>, window_params = [{pipeline_mode = #tpu.pipeline_mode<synchronous>, transform_indices = @transform_0, window_bounds = array<i64: 8, 128>}, {transform_indices = @transform_1, window_bounds = array<i64: 128, 128>}, {transform_indices = @transform_2, window_bounds = array<i64: 1, 128>}, {transform_indices = @transform_3, window_bounds = array<i64: 8, 128>}]} {
    %c0 = arith.constant 0 : index
    %c0_0 = arith.constant 0 : index
    %0 = vector.load %arg1[%c0, %c0_0] : memref<8x128xbf16, #tpu.memory_space<vmem>>, vector<8x128xbf16>
    %c0_1 = arith.constant 0 : index
    %c0_2 = arith.constant 0 : index
    %1 = vector.load %arg2[%c0_1, %c0_2] : memref<128x128xbf16, #tpu.memory_space<vmem>>, vector<128x128xbf16>
    %cst = arith.constant dense<0.000000e+00> : vector<8x128xf32>
    %2 = tpu.matmul %0, %1, %cst {dimension_numbers = #tpu.dot_dimension_numbers<[1], [0], [0], [1], [0, 0, 1, 1], [], []>} : vector<8x128xbf16>, vector<128x128xbf16>, vector<8x128xf32> -> vector<8x128xf32>
    %c0_3 = arith.constant 0 : index
    %c0_4 = arith.constant 0 : index
    %3 = vector.load %arg3[%c0_3, %c0_4] : memref<1x128xf32, #tpu.memory_space<vmem>>, vector<1x128xf32>
    %4 = vector.broadcast %3 : vector<1x128xf32> to vector<8x128xf32>
    %5 = arith.addf %2, %4 : vector<8x128xf32>
    %c0_5 = arith.constant 0 : index
    %c0_6 = arith.constant 0 : index
    %6 = vector.load %arg4[%c0_5, %c0_6] : memref<8x128xf32, #tpu.memory_space<vmem>>, vector<8x128xf32>
    tpu.vector_store %arg4[%c0_5, %c0_6], %5 {strides = array<i32>} : memref<8x128xf32, #tpu.memory_space<vmem>>, vector<8x128xf32>,
    return
  }
  func.func @transform_0(%arg0: i32) -> (i32, i32) {
    %c0_i32 = arith.constant 0 : i32
    %c0_i32_0 = arith.constant 0 : i32
    %c0_i32_1 = arith.constant 0 : i32
    return %c0_i32, %c0_i32_0 : i32, i32
  }
  func.func @transform_1(%arg0: i32) -> (i32, i32) {
    %c0_i32 = arith.constant 0 : i32
    %c0_i32_0 = arith.constant 0 : i32
    return %c0_i32, %arg0 : i32, i32
  }
  func.func @transform_2(%arg0: i32) -> (i32, i32) {
    %c0_i32 = arith.constant 0 : i32
    %c0_i32_0 = arith.constant 0 : i32
    return %c0_i32, %arg0 : i32, i32
  }
  func.func @transform_3(%arg0: i32) -> (i32, i32) {
    %c0_i32 = arith.constant 0 : i32
    %c0_i32_0 = arith.constant 0 : i32
    return %c0_i32, %arg0 : i32, i32
  }
}

module attributes {stable_mosaic.version = 11 : i64} {
  func.func @_lstm_cells_kernel(%arg0: memref<8x128xbf16, #tpu.memory_space<vmem>>, %arg1: memref<3x8x128xf32, #tpu.memory_space<vmem>>, %arg2: memref<3x8x128xf32, #tpu.memory_space<vmem>>, %arg3: memref<256x512xbf16, #tpu.memory_space<vmem>>, %arg4: memref<256x512xbf16, #tpu.memory_space<vmem>>, %arg5: memref<256x512xbf16, #tpu.memory_space<vmem>>, %arg6: memref<1x512xf32, #tpu.memory_space<vmem>>, %arg7: memref<1x512xf32, #tpu.memory_space<vmem>>, %arg8: memref<1x512xf32, #tpu.memory_space<vmem>>, %arg9: memref<3x8x128xf32, #tpu.memory_space<vmem>>, %arg10: memref<3x8x128xf32, #tpu.memory_space<vmem>>) attributes {dimension_semantics = [], scalar_prefetch = 0 : i64, scratch_operands = 0 : i64, tpu.core_type = #tpu.core_type<tc>} {
    %c0 = arith.constant 0 : index
    %c0_0 = arith.constant 0 : index
    %0 = vector.load %arg0[%c0, %c0_0] : memref<8x128xbf16, #tpu.memory_space<vmem>>, vector<8x128xbf16>
    %c0_1 = arith.constant 0 : index
    %c0_2 = arith.constant 0 : index
    %c0_3 = arith.constant 0 : index
    %1 = vector.load %arg1[%c0_1, %c0_2, %c0_3] : memref<3x8x128xf32, #tpu.memory_space<vmem>>, vector<1x8x128xf32>
    %2 = vector.shape_cast %1 : vector<1x8x128xf32> to vector<8x128xf32>
    %3 = arith.truncf %2 : vector<8x128xf32> to vector<8x128xbf16>
    %4 = tpu.concatenate %0, %3 in 1 : vector<8x128xbf16>, vector<8x128xbf16> -> vector<8x256xbf16>
    %c0_4 = arith.constant 0 : index
    %c0_5 = arith.constant 0 : index
    %c0_6 = arith.constant 0 : index
    %5 = vector.load %arg2[%c0_4, %c0_5, %c0_6] : memref<3x8x128xf32, #tpu.memory_space<vmem>>, vector<1x8x128xf32>
    %6 = vector.shape_cast %5 : vector<1x8x128xf32> to vector<8x128xf32>
    %c0_7 = arith.constant 0 : index
    %c0_8 = arith.constant 0 : index
    %7 = vector.load %arg3[%c0_7, %c0_8] : memref<256x512xbf16, #tpu.memory_space<vmem>>, vector<256x512xbf16>
    %cst = arith.constant dense<0.000000e+00> : vector<8x512xf32>
    %8 = tpu.matmul %4, %7, %cst {dimension_numbers = #tpu.dot_dimension_numbers<[1], [0], [0], [1], [0, 0, 1, 1], [], []>} : vector<8x256xbf16>, vector<256x512xbf16>, vector<8x512xf32> -> vector<8x512xf32>
    %c0_9 = arith.constant 0 : index
    %c0_10 = arith.constant 0 : index
    %9 = vector.load %arg6[%c0_9, %c0_10] : memref<1x512xf32, #tpu.memory_space<vmem>>, vector<1x512xf32>
    %10 = vector.broadcast %9 : vector<1x512xf32> to vector<8x512xf32>
    %11 = arith.addf %8, %10 : vector<8x512xf32>
    %12 = vector.extract_strided_slice %11 {offsets = [0, 0], sizes = [8, 128], strides = [1, 1]} : vector<8x512xf32> to vector<8x128xf32>
    %13 = arith.negf %12 : vector<8x128xf32>
    %14 = math.exp %13 : vector<8x128xf32>
    %cst_11 = arith.constant 1.000000e+00 : f32
    %15 = vector.broadcast %cst_11 : f32 to vector<8x128xf32>
    %16 = arith.addf %15, %14 : vector<8x128xf32>
    %17 = arith.divf %15, %16 : vector<8x128xf32>
    %18 = vector.extract_strided_slice %11 {offsets = [0, 128], sizes = [8, 128], strides = [1, 1]} : vector<8x512xf32> to vector<8x128xf32>
    %19 = arith.negf %18 : vector<8x128xf32>
    %20 = math.exp %19 : vector<8x128xf32>
    %cst_12 = arith.constant 1.000000e+00 : f32
    %21 = vector.broadcast %cst_12 : f32 to vector<8x128xf32>
    %22 = arith.addf %21, %20 : vector<8x128xf32>
    %23 = arith.divf %21, %22 : vector<8x128xf32>
    %24 = vector.extract_strided_slice %11 {offsets = [0, 256], sizes = [8, 128], strides = [1, 1]} : vector<8x512xf32> to vector<8x128xf32>
    %25 = math.tanh %24 : vector<8x128xf32>
    %26 = vector.extract_strided_slice %11 {offsets = [0, 384], sizes = [8, 128], strides = [1, 1]} : vector<8x512xf32> to vector<8x128xf32>
    %27 = arith.negf %26 : vector<8x128xf32>
    %28 = math.exp %27 : vector<8x128xf32>
    %cst_13 = arith.constant 1.000000e+00 : f32
    %29 = vector.broadcast %cst_13 : f32 to vector<8x128xf32>
    %30 = arith.addf %29, %28 : vector<8x128xf32>
    %31 = arith.divf %29, %30 : vector<8x128xf32>
    %32 = arith.mulf %23, %6 : vector<8x128xf32>
    %33 = arith.mulf %17, %25 : vector<8x128xf32>
    %34 = arith.addf %32, %33 : vector<8x128xf32>
    %35 = math.tanh %34 : vector<8x128xf32>
    %36 = arith.mulf %31, %35 : vector<8x128xf32>
    %37 = arith.truncf %36 : vector<8x128xf32> to vector<8x128xbf16>
    %c1 = arith.constant 1 : index
    %c0_14 = arith.constant 0 : index
    %c0_15 = arith.constant 0 : index
    %38 = vector.load %arg1[%c1, %c0_14, %c0_15] : memref<3x8x128xf32, #tpu.memory_space<vmem>>, vector<1x8x128xf32>
    %39 = vector.shape_cast %38 : vector<1x8x128xf32> to vector<8x128xf32>
    %40 = arith.truncf %39 : vector<8x128xf32> to vector<8x128xbf16>
    %41 = tpu.concatenate %37, %40 in 1 : vector<8x128xbf16>, vector<8x128xbf16> -> vector<8x256xbf16>
    %c1_16 = arith.constant 1 : index
    %c0_17 = arith.constant 0 : index
    %c0_18 = arith.constant 0 : index
    %42 = vector.load %arg2[%c1_16, %c0_17, %c0_18] : memref<3x8x128xf32, #tpu.memory_space<vmem>>, vector<1x8x128xf32>
    %43 = vector.shape_cast %42 : vector<1x8x128xf32> to vector<8x128xf32>
    %c0_19 = arith.constant 0 : index
    %c0_20 = arith.constant 0 : index
    %44 = vector.load %arg4[%c0_19, %c0_20] : memref<256x512xbf16, #tpu.memory_space<vmem>>, vector<256x512xbf16>
    %cst_21 = arith.constant dense<0.000000e+00> : vector<8x512xf32>
    %45 = tpu.matmul %41, %44, %cst_21 {dimension_numbers = #tpu.dot_dimension_numbers<[1], [0], [0], [1], [0, 0, 1, 1], [], []>} : vector<8x256xbf16>, vector<256x512xbf16>, vector<8x512xf32> -> vector<8x512xf32>
    %c0_22 = arith.constant 0 : index
    %c0_23 = arith.constant 0 : index
    %46 = vector.load %arg7[%c0_22, %c0_23] : memref<1x512xf32, #tpu.memory_space<vmem>>, vector<1x512xf32>
    %47 = vector.broadcast %46 : vector<1x512xf32> to vector<8x512xf32>
    %48 = arith.addf %45, %47 : vector<8x512xf32>
    %49 = vector.extract_strided_slice %48 {offsets = [0, 0], sizes = [8, 128], strides = [1, 1]} : vector<8x512xf32> to vector<8x128xf32>
    %50 = arith.negf %49 : vector<8x128xf32>
    %51 = math.exp %50 : vector<8x128xf32>
    %cst_24 = arith.constant 1.000000e+00 : f32
    %52 = vector.broadcast %cst_24 : f32 to vector<8x128xf32>
    %53 = arith.addf %52, %51 : vector<8x128xf32>
    %54 = arith.divf %52, %53 : vector<8x128xf32>
    %55 = vector.extract_strided_slice %48 {offsets = [0, 128], sizes = [8, 128], strides = [1, 1]} : vector<8x512xf32> to vector<8x128xf32>
    %56 = arith.negf %55 : vector<8x128xf32>
    %57 = math.exp %56 : vector<8x128xf32>
    %cst_25 = arith.constant 1.000000e+00 : f32
    %58 = vector.broadcast %cst_25 : f32 to vector<8x128xf32>
    %59 = arith.addf %58, %57 : vector<8x128xf32>
    %60 = arith.divf %58, %59 : vector<8x128xf32>
    %61 = vector.extract_strided_slice %48 {offsets = [0, 256], sizes = [8, 128], strides = [1, 1]} : vector<8x512xf32> to vector<8x128xf32>
    %62 = math.tanh %61 : vector<8x128xf32>
    %63 = vector.extract_strided_slice %48 {offsets = [0, 384], sizes = [8, 128], strides = [1, 1]} : vector<8x512xf32> to vector<8x128xf32>
    %64 = arith.negf %63 : vector<8x128xf32>
    %65 = math.exp %64 : vector<8x128xf32>
    %cst_26 = arith.constant 1.000000e+00 : f32
    %66 = vector.broadcast %cst_26 : f32 to vector<8x128xf32>
    %67 = arith.addf %66, %65 : vector<8x128xf32>
    %68 = arith.divf %66, %67 : vector<8x128xf32>
    %69 = arith.mulf %60, %43 : vector<8x128xf32>
    %70 = arith.mulf %54, %62 : vector<8x128xf32>
    %71 = arith.addf %69, %70 : vector<8x128xf32>
    %72 = math.tanh %71 : vector<8x128xf32>
    %73 = arith.mulf %68, %72 : vector<8x128xf32>
    %74 = arith.truncf %73 : vector<8x128xf32> to vector<8x128xbf16>
    %c2 = arith.constant 2 : index
    %c0_27 = arith.constant 0 : index
    %c0_28 = arith.constant 0 : index
    %75 = vector.load %arg1[%c2, %c0_27, %c0_28] : memref<3x8x128xf32, #tpu.memory_space<vmem>>, vector<1x8x128xf32>
    %76 = vector.shape_cast %75 : vector<1x8x128xf32> to vector<8x128xf32>
    %77 = arith.truncf %76 : vector<8x128xf32> to vector<8x128xbf16>
    %78 = tpu.concatenate %74, %77 in 1 : vector<8x128xbf16>, vector<8x128xbf16> -> vector<8x256xbf16>
    %c2_29 = arith.constant 2 : index
    %c0_30 = arith.constant 0 : index
    %c0_31 = arith.constant 0 : index
    %79 = vector.load %arg2[%c2_29, %c0_30, %c0_31] : memref<3x8x128xf32, #tpu.memory_space<vmem>>, vector<1x8x128xf32>
    %80 = vector.shape_cast %79 : vector<1x8x128xf32> to vector<8x128xf32>
    %c0_32 = arith.constant 0 : index
    %c0_33 = arith.constant 0 : index
    %81 = vector.load %arg5[%c0_32, %c0_33] : memref<256x512xbf16, #tpu.memory_space<vmem>>, vector<256x512xbf16>
    %cst_34 = arith.constant dense<0.000000e+00> : vector<8x512xf32>
    %82 = tpu.matmul %78, %81, %cst_34 {dimension_numbers = #tpu.dot_dimension_numbers<[1], [0], [0], [1], [0, 0, 1, 1], [], []>} : vector<8x256xbf16>, vector<256x512xbf16>, vector<8x512xf32> -> vector<8x512xf32>
    %c0_35 = arith.constant 0 : index
    %c0_36 = arith.constant 0 : index
    %83 = vector.load %arg8[%c0_35, %c0_36] : memref<1x512xf32, #tpu.memory_space<vmem>>, vector<1x512xf32>
    %84 = vector.broadcast %83 : vector<1x512xf32> to vector<8x512xf32>
    %85 = arith.addf %82, %84 : vector<8x512xf32>
    %86 = vector.extract_strided_slice %85 {offsets = [0, 0], sizes = [8, 128], strides = [1, 1]} : vector<8x512xf32> to vector<8x128xf32>
    %87 = arith.negf %86 : vector<8x128xf32>
    %88 = math.exp %87 : vector<8x128xf32>
    %cst_37 = arith.constant 1.000000e+00 : f32
    %89 = vector.broadcast %cst_37 : f32 to vector<8x128xf32>
    %90 = arith.addf %89, %88 : vector<8x128xf32>
    %91 = arith.divf %89, %90 : vector<8x128xf32>
    %92 = vector.extract_strided_slice %85 {offsets = [0, 128], sizes = [8, 128], strides = [1, 1]} : vector<8x512xf32> to vector<8x128xf32>
    %93 = arith.negf %92 : vector<8x128xf32>
    %94 = math.exp %93 : vector<8x128xf32>
    %cst_38 = arith.constant 1.000000e+00 : f32
    %95 = vector.broadcast %cst_38 : f32 to vector<8x128xf32>
    %96 = arith.addf %95, %94 : vector<8x128xf32>
    %97 = arith.divf %95, %96 : vector<8x128xf32>
    %98 = vector.extract_strided_slice %85 {offsets = [0, 256], sizes = [8, 128], strides = [1, 1]} : vector<8x512xf32> to vector<8x128xf32>
    %99 = math.tanh %98 : vector<8x128xf32>
    %100 = vector.extract_strided_slice %85 {offsets = [0, 384], sizes = [8, 128], strides = [1, 1]} : vector<8x512xf32> to vector<8x128xf32>
    %101 = arith.negf %100 : vector<8x128xf32>
    %102 = math.exp %101 : vector<8x128xf32>
    %cst_39 = arith.constant 1.000000e+00 : f32
    %103 = vector.broadcast %cst_39 : f32 to vector<8x128xf32>
    %104 = arith.addf %103, %102 : vector<8x128xf32>
    %105 = arith.divf %103, %104 : vector<8x128xf32>
    %106 = arith.mulf %97, %80 : vector<8x128xf32>
    %107 = arith.mulf %91, %99 : vector<8x128xf32>
    %108 = arith.addf %106, %107 : vector<8x128xf32>
    %109 = math.tanh %108 : vector<8x128xf32>
    %110 = arith.mulf %105, %109 : vector<8x128xf32>
    %c0_40 = arith.constant 0 : index
    %c0_41 = arith.constant 0 : index
    %c0_42 = arith.constant 0 : index
    %111 = vector.load %arg9[%c0_40, %c0_41, %c0_42] : memref<3x8x128xf32, #tpu.memory_space<vmem>>, vector<1x8x128xf32>
    %112 = vector.shape_cast %111 : vector<1x8x128xf32> to vector<8x128xf32>
    %113 = vector.shape_cast %36 : vector<8x128xf32> to vector<1x8x128xf32>
    tpu.vector_store %arg9[%c0_40, %c0_41, %c0_42], %113 {strides = array<i32>} : memref<3x8x128xf32, #tpu.memory_space<vmem>>, vector<1x8x128xf32>,
    %c1_43 = arith.constant 1 : index
    %c0_44 = arith.constant 0 : index
    %c0_45 = arith.constant 0 : index
    %114 = vector.load %arg9[%c1_43, %c0_44, %c0_45] : memref<3x8x128xf32, #tpu.memory_space<vmem>>, vector<1x8x128xf32>
    %115 = vector.shape_cast %114 : vector<1x8x128xf32> to vector<8x128xf32>
    %116 = vector.shape_cast %73 : vector<8x128xf32> to vector<1x8x128xf32>
    tpu.vector_store %arg9[%c1_43, %c0_44, %c0_45], %116 {strides = array<i32>} : memref<3x8x128xf32, #tpu.memory_space<vmem>>, vector<1x8x128xf32>,
    %c2_46 = arith.constant 2 : index
    %c0_47 = arith.constant 0 : index
    %c0_48 = arith.constant 0 : index
    %117 = vector.load %arg9[%c2_46, %c0_47, %c0_48] : memref<3x8x128xf32, #tpu.memory_space<vmem>>, vector<1x8x128xf32>
    %118 = vector.shape_cast %117 : vector<1x8x128xf32> to vector<8x128xf32>
    %119 = vector.shape_cast %110 : vector<8x128xf32> to vector<1x8x128xf32>
    tpu.vector_store %arg9[%c2_46, %c0_47, %c0_48], %119 {strides = array<i32>} : memref<3x8x128xf32, #tpu.memory_space<vmem>>, vector<1x8x128xf32>,
    %c0_49 = arith.constant 0 : index
    %c0_50 = arith.constant 0 : index
    %c0_51 = arith.constant 0 : index
    %120 = vector.load %arg10[%c0_49, %c0_50, %c0_51] : memref<3x8x128xf32, #tpu.memory_space<vmem>>, vector<1x8x128xf32>
    %121 = vector.shape_cast %120 : vector<1x8x128xf32> to vector<8x128xf32>
    %122 = vector.shape_cast %34 : vector<8x128xf32> to vector<1x8x128xf32>
    tpu.vector_store %arg10[%c0_49, %c0_50, %c0_51], %122 {strides = array<i32>} : memref<3x8x128xf32, #tpu.memory_space<vmem>>, vector<1x8x128xf32>,
    %c1_52 = arith.constant 1 : index
    %c0_53 = arith.constant 0 : index
    %c0_54 = arith.constant 0 : index
    %123 = vector.load %arg10[%c1_52, %c0_53, %c0_54] : memref<3x8x128xf32, #tpu.memory_space<vmem>>, vector<1x8x128xf32>
    %124 = vector.shape_cast %123 : vector<1x8x128xf32> to vector<8x128xf32>
    %125 = vector.shape_cast %71 : vector<8x128xf32> to vector<1x8x128xf32>
    tpu.vector_store %arg10[%c1_52, %c0_53, %c0_54], %125 {strides = array<i32>} : memref<3x8x128xf32, #tpu.memory_space<vmem>>, vector<1x8x128xf32>,
    %c2_55 = arith.constant 2 : index
    %c0_56 = arith.constant 0 : index
    %c0_57 = arith.constant 0 : index
    %126 = vector.load %arg10[%c2_55, %c0_56, %c0_57] : memref<3x8x128xf32, #tpu.memory_space<vmem>>, vector<1x8x128xf32>
    %127 = vector.shape_cast %126 : vector<1x8x128xf32> to vector<8x128xf32>
    %128 = vector.shape_cast %108 : vector<8x128xf32> to vector<1x8x128xf32>
    tpu.vector_store %arg10[%c2_55, %c0_56, %c0_57], %128 {strides = array<i32>} : memref<3x8x128xf32, #tpu.memory_space<vmem>>, vector<1x8x128xf32>,
    return
  }
}

</mosaic_0001>

<llo_original>
// kernel: generator_forward.3
$region0: #{generator_forward.3}
  #allocation0 [shape = 'u32[]', space=smem, size = 0x4, offset = 0x4, fixed_abs, tag = 'smem constant byte address 0x4 - core index']
  #allocation1 [shape = 'u32[72,128]{1,0:T(1,128)}', space=vmem, size = 0x9000, scoped, tag = 'internal scratch']
  %s0 = inlined_call_operand.vmem [shape: bf16[8,128], index: 0, kind: input, shape index: {}]
  %s1 = inlined_call_operand.vmem [shape: bf16[128,128], index: 1, kind: input, shape index: {}]
  %s2 = inlined_call_operand.vmem [shape: f32[1,128], index: 2, kind: input, shape index: {}]
  %s3 = inlined_call_operand.vmem [shape: f32[8,128], index: 3, kind: output, shape index: {}]
  %s4 = sld [smem:[#allocation0]]
  $region22: #{generator_forward.3} parent=0
    _
  %s6 = ssub.s32 1, %s4
  %s7 = scalar_select 0, %s6, %s4
  // Predicated region
  $region2: #{generator_forward.3} parent=0 // pred_check
    _
  $region3: #{generator_forward.3} parent=0 // pred_check_branch
    %9 = sbr.rel (0) target = $region5
  $region4: #{generator_forward.3} parent=0 // pred_region
    _
  $region5: #{generator_forward.3} parent=0 // pred_fallthru
    _
  // Predicated region
  $region6: #{generator_forward.3} parent=0 // pred_check
    _
  $region7: #{generator_forward.3} parent=0 // pred_check_branch
    %11 = sbr.rel (0) target = $region9
  $region8: #{generator_forward.3} parent=0 // pred_region
    _
  $region9: #{generator_forward.3} parent=0 // pred_fallthru
    _
  // Predicated region
  $region10: #{generator_forward.3} parent=0 // pred_check
    _
  $region11: #{generator_forward.3} parent=0 // pred_check_branch
    %13 = sbr.rel (0) target = $region13
  $region12: #{generator_forward.3} parent=0 // pred_region
    _
  $region13: #{generator_forward.3} parent=0 // pred_fallthru
    _
  %v14 = vld [vmem:[%s0] sm:$0xf]
  %v15 = vld [vmem:[%s1] sm:$0xf]
  %v16 = vld [vmem:[%s1 + $0x4] sm:$0xf]
  %v17 = vld [vmem:[%s1 + $0x8] sm:$0xf]
  %v18 = vld [vmem:[%s1 + $0xc] sm:$0xf]
  %v19 = vld [vmem:[%s1 + $0x10] sm:$0xf]
  %v20 = vld [vmem:[%s1 + $0x14] sm:$0xf]
  %v21 = vld [vmem:[%s1 + $0x18] sm:$0xf]
  %v22 = vld [vmem:[%s1 + $0x1c] sm:$0xf]
  %v23 = vld [vmem:[%s1 + $0x20] sm:$0xf]
  %v24 = vld [vmem:[%s1 + $0x24] sm:$0xf]
  %v25 = vld [vmem:[%s1 + $0x28] sm:$0xf]
  %v26 = vld [vmem:[%s1 + $0x2c] sm:$0xf]
  %v27 = vld [vmem:[%s1 + $0x30] sm:$0xf]
  %v28 = vld [vmem:[%s1 + $0x34] sm:$0xf]
  %v29 = vld [vmem:[%s1 + $0x38] sm:$0xf]
  %v30 = vld [vmem:[%s1 + $0x3c] sm:$0xf]
  %v31 = vld [vmem:[%s2] sm:$0x1]
  %v33 = vperm.slane %v31, 0
  %v51 = vunpack.c.l.b16 %v15
  %v52 = vunpack.c.l.b16 %v16
  %v53 = vunpack.c.l.b16 %v17
  %v54 = vunpack.c.l.b16 %v18
  %v55 = vunpack.c.l.b16 %v19
  %v56 = vunpack.c.l.b16 %v20
  %v57 = vunpack.c.l.b16 %v21
  %v58 = vunpack.c.l.b16 %v22
  %v59 = vunpack.c.l.b16 %v23
  %v60 = vunpack.c.l.b16 %v24
  %v61 = vunpack.c.l.b16 %v25
  %v62 = vunpack.c.l.b16 %v26
  %v63 = vunpack.c.l.b16 %v27
  %v64 = vunpack.c.l.b16 %v28
  %v65 = vunpack.c.l.b16 %v29
  %v66 = vunpack.c.l.b16 %v30
  %v67 = vpack.c.b16 %v52, %v51
  %v68 = vpack.c.b16 %v54, %v53
  %v69 = vpack.c.b16 %v56, %v55
  %v70 = vpack.c.b16 %v58, %v57
  %v71 = vpack.c.b16 %v60, %v59
  %v72 = vpack.c.b16 %v62, %v61
  %v73 = vpack.c.b16 %v64, %v63
  %v74 = vpack.c.b16 %v66, %v65
  %83 = vmatpush.bf16.msra.mxu0 %v74
  %84 = vmatpush.bf16.msra.mxu0 %v73
  %85 = vmatpush.bf16.msra.mxu0 %v72
  %86 = vmatpush.bf16.msra.mxu0 %v71
  %87 = vmatpush.bf16.msra.mxu0 %v70
  %88 = vmatpush.bf16.msra.mxu0 %v69
  %89 = vmatpush.bf16.msra.mxu0 %v68
  %90 = vmatpush.bf16.msra.mxu0 %v67
  %91 = vmatmul.bf16.gmra.mxu0 %v14
  %v92 = vpop.f32.mrf.mxu0
  %v93 = vadd.f32 %v33, %v92
  %v94 = vpop.f32.mrf.mxu0
  %95 = vdwg.mxu0
  %96 = vst [vmem:[%s3] sm:$0xff] %v93
  // Predicated region
  $region14: #{generator_forward.3} parent=0 // pred_check
    _
  $region15: #{generator_forward.3} parent=0 // pred_check_branch
    %98 = sbr.rel (0) target = $region17
  $region16: #{generator_forward.3} parent=0 // pred_region
    _
  $region17: #{generator_forward.3} parent=0 // pred_fallthru
    _
  // Predicated region
  $region18: #{generator_forward.3} parent=0 // pred_check
    _
  $region19: #{generator_forward.3} parent=0 // pred_check_branch
    %100 = sbr.rel (0) target = $region21
  $region20: #{generator_forward.3} parent=0 // pred_region
    _
  $region21: #{generator_forward.3} parent=0 // pred_fallthru
    _

// kernel: generator_forward.2
$region0: #{generator_forward.2}
  #allocation0 [shape = 'u32[]', space=smem, size = 0x4, offset = 0x4, fixed_abs, tag = 'smem constant byte address 0x4 - core index']
  #allocation1 [shape = 'u32[72,128]{1,0:T(1,128)}', space=vmem, size = 0x9000, scoped, tag = 'internal scratch']
  %s0 = inlined_call_operand.vmem [shape: bf16[8,128], index: 0, kind: input, shape index: {}]
  %s1 = inlined_call_operand.vmem [shape: f32[3,8,128], index: 1, kind: input, shape index: {}]
  %s2 = inlined_call_operand.vmem [shape: f32[3,8,128], index: 2, kind: input, shape index: {}]
  %s3 = inlined_call_operand.hbm [shape: bf16[256,512], index: 3, kind: input, shape index: {}]
  %s4 = inlined_call_operand.hbm [shape: bf16[256,512], index: 4, kind: input, shape index: {}]
  %s5 = inlined_call_operand.hbm [shape: bf16[256,512], index: 5, kind: input, shape index: {}]
  %s6 = inlined_call_operand.vmem [shape: f32[1,512], index: 6, kind: input, shape index: {}]
  %s7 = inlined_call_operand.vmem [shape: f32[1,512], index: 7, kind: input, shape index: {}]
  %s8 = inlined_call_operand.vmem [shape: f32[1,512], index: 8, kind: input, shape index: {}]
  %s9 = inlined_call_operand.vmem [shape: f32[3,8,128], index: 9, kind: output, shape index: {0}]
  %s10 = inlined_call_operand.vmem [shape: f32[3,8,128], index: 10, kind: output, shape index: {1}]
  %11 = xla_tuple %s9, %s10
  %s12 = sld [smem:[#allocation0]]
  $region66: #{generator_forward.2} parent=0
    _
  %s14 = ssub.s32 1, %s12
  %s15 = scalar_select 0, %s14, %s12
  $region1: #{generator_forward.2} parent=0
    #allocation2 [shape = 'u8[262144]{0}', space=vmem, size = 0x40000, scoped, tag = 'input window, operand 3, single buffered']
    #allocation3 [shape = 's32[1]{0}', space=sflag, size = 0x4, scoped, tag = 'scoped memory for generator_forward.2']
    #allocation4 [shape = 'u8[262144]{0}', space=vmem, size = 0x40000, scoped, tag = 'input window, operand 4, single buffered']
    #allocation5 [shape = 's32[1]{0}', space=sflag, size = 0x4, scoped, tag = 'scoped memory for generator_forward.2']
    #allocation6 [shape = 'u8[262144]{0}', space=vmem, size = 0x40000, scoped, tag = 'input window, operand 5, single buffered']
    %16 = vsyncpa [#allocation3], 0
    %17 = vsyncpa [#allocation5], 0
    // Predicated region
    $region2: #{generator_forward.2} parent=1 // pred_check
      _
    $region3: #{generator_forward.2} parent=1 // pred_check_branch
      %19 = sbr.rel (0) target = $region5
    $region4: #{generator_forward.2} parent=1 // pred_region
      _
    $region5: #{generator_forward.2} parent=1 // pred_fallthru
      _
    // Predicated region
    $region6: #{generator_forward.2} parent=1 // pred_check
      _
    $region7: #{generator_forward.2} parent=1 // pred_check_branch
      %21 = sbr.rel (0) target = $region9
    $region8: #{generator_forward.2} parent=1 // pred_region
      _
    $region9: #{generator_forward.2} parent=1 // pred_fallthru
      _
    // Predicated region
    $region10: #{generator_forward.2} parent=1 // pred_check
      _
    $region11: #{generator_forward.2} parent=1 // pred_check_branch
      %23 = sbr.rel (0) target = $region13
    $region12: #{generator_forward.2} parent=1 // pred_region
      _
    $region13: #{generator_forward.2} parent=1 // pred_fallthru
      _
    // Predicated region
    $region14: #{generator_forward.2} parent=1 // pred_check
      _
    $region15: #{generator_forward.2} parent=1 // pred_check_branch
      %25 = sbr.rel (0) target = $region17
    $region16: #{generator_forward.2} parent=1 // pred_region
      %27 = vsyncadd [#allocation3], 0
      %s28 = sshll.u32 %s3, 4
      %s29 = int_to_ptr.hbm [resolvable:$true] %s28
      %s30 = sshll.u32 [#allocation2], 4
      %s31 = int_to_ptr.vmem [resolvable:$true] %s30
      %36 = dma.hbm_to_vmem [thread:$0]  %s29, 8192, %s31, [#allocation3], 256, 256, 16
    $region17: #{generator_forward.2} parent=1 // pred_fallthru
      _
    // Predicated region
    $region18: #{generator_forward.2} parent=1 // pred_check
      _
    $region19: #{generator_forward.2} parent=1 // pred_check_branch
      %38 = sbr.rel (0) target = $region21
    $region20: #{generator_forward.2} parent=1 // pred_region
      %40 = vsyncadd [#allocation5], 0
      %s41 = sshll.u32 %s4, 4
      %s42 = int_to_ptr.hbm [resolvable:$true] %s41
      %s43 = sshll.u32 [#allocation4], 4
      %s44 = int_to_ptr.vmem [resolvable:$true] %s43
      %49 = dma.hbm_to_vmem [thread:$0]  %s42, 8192, %s44, [#allocation5], 256, 256, 16
    $region21: #{generator_forward.2} parent=1 // pred_fallthru
      _
    // Predicated region
    $region22: #{generator_forward.2} parent=1 // pred_check
      _
    $region23: #{generator_forward.2} parent=1 // pred_check_branch
      %51 = sbr.rel (0) target = $region25
    $region24: #{generator_forward.2} parent=1 // pred_region
      %53 = vsyncadd [#allocation5], 0
      %s54 = sshll.u32 %s5, 4
      %s55 = int_to_ptr.hbm [resolvable:$true] %s54
      %s56 = sshll.u32 [#allocation6], 4
      %s57 = int_to_ptr.vmem [resolvable:$true] %s56
      %62 = dma.hbm_to_vmem [thread:$0]  %s55, 8192, %s57, [#allocation5], 256, 256, 16
    $region25: #{generator_forward.2} parent=1 // pred_fallthru
      _
    // Predicated region
    $region26: #{generator_forward.2} parent=1 // pred_check
      _
    $region27: #{generator_forward.2} parent=1 // pred_check_branch
      %64 = sbr.rel (0) target = $region29
    $region28: #{generator_forward.2} parent=1 // pred_region
      _
    $region29: #{generator_forward.2} parent=1 // pred_fallthru
      _
    // Predicated region
    $region30: #{generator_forward.2} parent=1 // pred_check
      _
    $region31: #{generator_forward.2} parent=1 // pred_check_branch
      %66 = sbr.rel (0) target = $region33
    $region32: #{generator_forward.2} parent=1 // pred_region
      _
    $region33: #{generator_forward.2} parent=1 // pred_fallthru
      _
    // Predicated region
    $region34: #{generator_forward.2} parent=1 // pred_check
      _
    $region35: #{generator_forward.2} parent=1 // pred_check_branch
      %68 = sbr.rel (0) target = $region37
    $region36: #{generator_forward.2} parent=1 // pred_region
      _
    $region37: #{generator_forward.2} parent=1 // pred_fallthru
      _
    // Predicated region
    $region38: #{generator_forward.2} parent=1 // pred_check
      _
    $region39: #{generator_forward.2} parent=1 // pred_check_branch
      %70 = sbr.rel (0) target = $region41
    $region40: #{generator_forward.2} parent=1 // pred_region
      %72 = dma.done [#allocation3], 8192
    $region41: #{generator_forward.2} parent=1 // pred_fallthru
      _
    // Predicated region
    $region42: #{generator_forward.2} parent=1 // pred_check
      _
    $region43: #{generator_forward.2} parent=1 // pred_check_branch
      %74 = sbr.rel (0) target = $region45
    $region44: #{generator_forward.2} parent=1 // pred_region
      %76 = dma.done [#allocation5], 8192
    $region45: #{generator_forward.2} parent=1 // pred_fallthru
      _
    // Predicated region
    $region46: #{generator_forward.2} parent=1 // pred_check
      _
    $region47: #{generator_forward.2} parent=1 // pred_check_branch
      %78 = sbr.rel (0) target = $region49
    $region48: #{generator_forward.2} parent=1 // pred_region
      %80 = dma.done [#allocation5], 8192
    $region49: #{generator_forward.2} parent=1 // pred_fallthru
      _
    %v81 = vld [vmem:[%s0] sm:$0xf]
    %v82 = vld [vmem:[%s1] sm:$0xff]
    %v83 = vpack.c.bf16 %v82, %v82
    %v84 = vld [vmem:[%s2] sm:$0xff]
    %v85 = vld [vmem:[#allocation2] sm:$0xff]
    %v86 = vld [vmem:[#allocation2 + $0x8] sm:$0xff]
    %v87 = vld [vmem:[#allocation2 + $0x10] sm:$0xff]
    %v88 = vld [vmem:[#allocation2 + $0x18] sm:$0xff]
    %v89 = vld [vmem:[#allocation2 + $0x20] sm:$0xff]
    %v90 = vld [vmem:[#allocation2 + $0x28] sm:$0xff]
    %v91 = vld [vmem:[#allocation2 + $0x30] sm:$0xff]
    %v92 = vld [vmem:[#allocation2 + $0x38] sm:$0xff]
    %v93 = vld [vmem:[#allocation2 + $0x40] sm:$0xff]
    %v94 = vld [vmem:[#allocation2 + $0x48] sm:$0xff]
    %v95 = vld [vmem:[#allocation2 + $0x50] sm:$0xff]
    %v96 = vld [vmem:[#allocation2 + $0x58] sm:$0xff]
    %v97 = vld [vmem:[#allocation2 + $0x60] sm:$0xff]
    %v98 = vld [vmem:[#allocation2 + $0x68] sm:$0xff]
    %v99 = vld [vmem:[#allocation2 + $0x70] sm:$0xff]
    %v100 = vld [vmem:[#allocation2 + $0x78] sm:$0xff]
    %v101 = vld [vmem:[#allocation2 + $0x80] sm:$0xff]
    %v102 = vld [vmem:[#allocation2 + $0x88] sm:$0xff]
    %v103 = vld [vmem:[#allocation2 + $0x90] sm:$0xff]
    %v104 = vld [vmem:[#allocation2 + $0x98] sm:$0xff]
    %v105 = vld [vmem:[#allocation2 + $0xa0] sm:$0xff]
    %v106 = vld [vmem:[#allocation2 + $0xa8] sm:$0xff]
    %v107 = vld [vmem:[#allocation2 + $0xb0] sm:$0xff]
    %v108 = vld [vmem:[#allocation2 + $0xb8] sm:$0xff]
    %v109 = vld [vmem:[#allocation2 + $0xc0] sm:$0xff]
    %v110 = vld [vmem:[#allocation2 + $0xc8] sm:$0xff]
    %v111 = vld [vmem:[#allocation2 + $0xd0] sm:$0xff]
    %v112 = vld [vmem:[#allocation2 + $0xd8] sm:$0xff]
    %v113 = vld [vmem:[#allocation2 + $0xe0] sm:$0xff]
    %v114 = vld [vmem:[#allocation2 + $0xe8] sm:$0xff]
    %v115 = vld [vmem:[#allocation2 + $0xf0] sm:$0xff]
    %v116 = vld [vmem:[#allocation2 + $0xf8] sm:$0xff]
    %v117 = vld [vmem:[#allocation2 + $0x100] sm:$0xff]
    %v118 = vld [vmem:[#allocation2 + $0x108] sm:$0xff]
    %v119 = vld [vmem:[#allocation2 + $0x110] sm:$0xff]
    %v120 = vld [vmem:[#allocation2 + $0x118] sm:$0xff]
    %v121 = vld [vmem:[#allocation2 + $0x120] sm:$0xff]
    %v122 = vld [vmem:[#allocation2 + $0x128] sm:$0xff]
    %v123 = vld [vmem:[#allocation2 + $0x130] sm:$0xff]
    %v124 = vld [vmem:[#allocation2 + $0x138] sm:$0xff]
    %v125 = vld [vmem:[#allocation2 + $0x140] sm:$0xff]
    %v126 = vld [vmem:[#allocation2 + $0x148] sm:$0xff]
    %v127 = vld [vmem:[#allocation2 + $0x150] sm:$0xff]
    %v128 = vld [vmem:[#allocation2 + $0x158] sm:$0xff]
    %v129 = vld [vmem:[#allocation2 + $0x160] sm:$0xff]
    %v130 = vld [vmem:[#allocation2 + $0x168] sm:$0xff]
    %v131 = vld [vmem:[#allocation2 + $0x170] sm:$0xff]
    %v132 = vld [vmem:[#allocation2 + $0x178] sm:$0xff]
    %v133 = vld [vmem:[#allocation2 + $0x180] sm:$0xff]
    %v134 = vld [vmem:[#allocation2 + $0x188] sm:$0xff]
    %v135 = vld [vmem:[#allocation2 + $0x190] sm:$0xff]
    %v136 = vld [vmem:[#allocation2 + $0x198] sm:$0xff]
    %v137 = vld [vmem:[#allocation2 + $0x1a0] sm:$0xff]
    %v138 = vld [vmem:[#allocation2 + $0x1a8] sm:$0xff]
    %v139 = vld [vmem:[#allocation2 + $0x1b0] sm:$0xff]
    %v140 = vld [vmem:[#allocation2 + $0x1b8] sm:$0xff]
    %v141 = vld [vmem:[#allocation2 + $0x1c0] sm:$0xff]
    %v142 = vld [vmem:[#allocation2 + $0x1c8] sm:$0xff]
    %v143 = vld [vmem:[#allocation2 + $0x1d0] sm:$0xff]
    %v144 = vld [vmem:[#allocation2 + $0x1d8] sm:$0xff]
    %v145 = vld [vmem:[#allocation2 + $0x1e0] sm:$0xff]
    %v146 = vld [vmem:[#allocation2 + $0x1e8] sm:$0xff]
    %v147 = vld [vmem:[#allocation2 + $0x1f0] sm:$0xff]
    %v148 = vld [vmem:[#allocation2 + $0x1f8] sm:$0xff]
    %v149 = vld [vmem:[%s6] sm:$0xf]
    %v151 = vperm.slane %v149, 0
    %v152 = vperm.slane %v149, 1
    %v153 = vperm.slane %v149, 2
    %v154 = vperm.slane %v149, 3
    %v223 = vunpack.c.l.b16 %v85
    %v224 = vunpack.c.h.b16 %v85
    %v225 = vunpack.c.l.b16 %v86
    %v226 = vunpack.c.h.b16 %v86
    %v227 = vunpack.c.l.b16 %v87
    %v228 = vunpack.c.h.b16 %v87
    %v229 = vunpack.c.l.b16 %v88
    %v230 = vunpack.c.h.b16 %v88
    %v231 = vunpack.c.l.b16 %v89
    %v232 = vunpack.c.h.b16 %v89
    %v233 = vunpack.c.l.b16 %v90
    %v234 = vunpack.c.h.b16 %v90
    %v235 = vunpack.c.l.b16 %v91
    %v236 = vunpack.c.h.b16 %v91
    %v237 = vunpack.c.l.b16 %v92
    %v238 = vunpack.c.h.b16 %v92
    %v239 = vunpack.c.l.b16 %v93
    %v240 = vunpack.c.h.b16 %v93
    %v241 = vunpack.c.l.b16 %v94
    %v242 = vunpack.c.h.b16 %v94
    %v243 = vunpack.c.l.b16 %v95
    %v244 = vunpack.c.h.b16 %v95
    %v245 = vunpack.c.l.b16 %v96
    %v246 = vunpack.c.h.b16 %v96
    %v247 = vunpack.c.l.b16 %v97
    %v248 = vunpack.c.h.b16 %v97
    %v249 = vunpack.c.l.b16 %v98
    %v250 = vunpack.c.h.b16 %v98
    %v251 = vunpack.c.l.b16 %v99
    %v252 = vunpack.c.h.b16 %v99
    %v253 = vunpack.c.l.b16 %v100
    %v254 = vunpack.c.h.b16 %v100
    %v255 = vunpack.c.l.b16 %v101
    %v256 = vunpack.c.h.b16 %v101
    %v257 = vunpack.c.l.b16 %v102
    %v258 = vunpack.c.h.b16 %v102
    %v259 = vunpack.c.l.b16 %v103
    %v260 = vunpack.c.h.b16 %v103
    %v261 = vunpack.c.l.b16 %v104
    %v262 = vunpack.c.h.b16 %v104
    %v263 = vunpack.c.l.b16 %v105
    %v264 = vunpack.c.h.b16 %v105
    %v265 = vunpack.c.l.b16 %v106
    %v266 = vunpack.c.h.b16 %v106
    %v267 = vunpack.c.l.b16 %v107
    %v268 = vunpack.c.h.b16 %v107
    %v269 = vunpack.c.l.b16 %v108
    %v270 = vunpack.c.h.b16 %v108
    %v271 = vunpack.c.l.b16 %v109
    %v272 = vunpack.c.h.b16 %v109
    %v273 = vunpack.c.l.b16 %v110
    %v274 = vunpack.c.h.b16 %v110
    %v275 = vunpack.c.l.b16 %v111
    %v276 = vunpack.c.h.b16 %v111
    %v277 = vunpack.c.l.b16 %v112
    %v278 = vunpack.c.h.b16 %v112
    %v279 = vunpack.c.l.b16 %v113
    %v280 = vunpack.c.h.b16 %v113
    %v281 = vunpack.c.l.b16 %v114
    %v282 = vunpack.c.h.b16 %v114
    %v283 = vunpack.c.l.b16 %v115
    %v284 = vunpack.c.h.b16 %v115
    %v285 = vunpack.c.l.b16 %v116
    %v286 = vunpack.c.h.b16 %v116
    %v287 = vunpack.c.l.b16 %v117
    %v288 = vunpack.c.h.b16 %v117
    %v289 = vunpack.c.l.b16 %v118
    %v290 = vunpack.c.h.b16 %v118
    %v291 = vunpack.c.l.b16 %v119
    %v292 = vunpack.c.h.b16 %v119
    %v293 = vunpack.c.l.b16 %v120
    %v294 = vunpack.c.h.b16 %v120
    %v295 = vunpack.c.l.b16 %v121
    %v296 = vunpack.c.h.b16 %v121
    %v297 = vunpack.c.l.b16 %v122
    %v298 = vunpack.c.h.b16 %v122
    %v299 = vunpack.c.l.b16 %v123
    %v300 = vunpack.c.h.b16 %v123
    %v301 = vunpack.c.l.b16 %v124
    %v302 = vunpack.c.h.b16 %v124
    %v303 = vunpack.c.l.b16 %v125
    %v304 = vunpack.c.h.b16 %v125
    %v305 = vunpack.c.l.b16 %v126
    %v306 = vunpack.c.h.b16 %v126
    %v307 = vunpack.c.l.b16 %v127
    %v308 = vunpack.c.h.b16 %v127
    %v309 = vunpack.c.l.b16 %v128
    %v310 = vunpack.c.h.b16 %v128
    %v311 = vunpack.c.l.b16 %v129
    %v312 = vunpack.c.h.b16 %v129
    %v313 = vunpack.c.l.b16 %v130
    %v314 = vunpack.c.h.b16 %v130
    %v315 = vunpack.c.l.b16 %v131
    %v316 = vunpack.c.h.b16 %v131
    %v317 = vunpack.c.l.b16 %v132
    %v318 = vunpack.c.h.b16 %v132
    %v319 = vunpack.c.l.b16 %v133
    %v320 = vunpack.c.h.b16 %v133
    %v321 = vunpack.c.l.b16 %v134
    %v322 = vunpack.c.h.b16 %v134
    %v323 = vunpack.c.l.b16 %v135
    %v324 = vunpack.c.h.b16 %v135
    %v325 = vunpack.c.l.b16 %v136
    %v326 = vunpack.c.h.b16 %v136
    %v327 = vunpack.c.l.b16 %v137
    %v328 = vunpack.c.h.b16 %v137
    %v329 = vunpack.c.l.b16 %v138
    %v330 = vunpack.c.h.b16 %v138
    %v331 = vunpack.c.l.b16 %v139
    %v332 = vunpack.c.h.b16 %v139
    %v333 = vunpack.c.l.b16 %v140
    %v334 = vunpack.c.h.b16 %v140
    %v335 = vunpack.c.l.b16 %v141
    %v336 = vunpack.c.h.b16 %v141
    %v337 = vunpack.c.l.b16 %v142
    %v338 = vunpack.c.h.b16 %v142
    %v339 = vunpack.c.l.b16 %v143
    %v340 = vunpack.c.h.b16 %v143
    %v341 = vunpack.c.l.b16 %v144
    %v342 = vunpack.c.h.b16 %v144
    %v343 = vunpack.c.l.b16 %v145
    %v344 = vunpack.c.h.b16 %v145
    %v345 = vunpack.c.l.b16 %v146
    %v346 = vunpack.c.h.b16 %v146
    %v347 = vunpack.c.l.b16 %v147
    %v348 = vunpack.c.h.b16 %v147
    %v349 = vunpack.c.l.b16 %v148
    %v350 = vunpack.c.h.b16 %v148
    %v351 = vpack.c.b16 %v227, %v223
    %v352 = vpack.c.b16 %v228, %v224
    %v353 = vpack.c.b16 %v229, %v225
    %v354 = vpack.c.b16 %v230, %v226
    %v355 = vpack.c.b16 %v235, %v231
    %v356 = vpack.c.b16 %v236, %v232
    %v357 = vpack.c.b16 %v237, %v233
    %v358 = vpack.c.b16 %v238, %v234
    %v359 = vpack.c.b16 %v243, %v239
    %v360 = vpack.c.b16 %v244, %v240
    %v361 = vpack.c.b16 %v245, %v241
    %v362 = vpack.c.b16 %v246, %v242
    %v363 = vpack.c.b16 %v251, %v247
    %v364 = vpack.c.b16 %v252, %v248
    %v365 = vpack.c.b16 %v253, %v249
    %v366 = vpack.c.b16 %v254, %v250
    %v367 = vpack.c.b16 %v259, %v255
    %v368 = vpack.c.b16 %v260, %v256
    %v369 = vpack.c.b16 %v261, %v257
    %v370 = vpack.c.b16 %v262, %v258
    %v371 = vpack.c.b16 %v267, %v263
    %v372 = vpack.c.b16 %v268, %v264
    %v373 = vpack.c.b16 %v269, %v265
    %v374 = vpack.c.b16 %v270, %v266
    %v375 = vpack.c.b16 %v275, %v271
    %v376 = vpack.c.b16 %v276, %v272
    %v377 = vpack.c.b16 %v277, %v273
    %v378 = vpack.c.b16 %v278, %v274
    %v379 = vpack.c.b16 %v283, %v279
    %v380 = vpack.c.b16 %v284, %v280
    %v381 = vpack.c.b16 %v285, %v281
    %v382 = vpack.c.b16 %v286, %v282
    %v383 = vpack.c.b16 %v291, %v287
    %v384 = vpack.c.b16 %v292, %v288
    %v385 = vpack.c.b16 %v293, %v289
    %v386 = vpack.c.b16 %v294, %v290
    %v387 = vpack.c.b16 %v299, %v295
    %v388 = vpack.c.b16 %v300, %v296
    %v389 = vpack.c.b16 %v301, %v297
    %v390 = vpack.c.b16 %v302, %v298
    %v391 = vpack.c.b16 %v307, %v303
    %v392 = vpack.c.b16 %v308, %v304
    %v393 = vpack.c.b16 %v309, %v305
    %v394 = vpack.c.b16 %v310, %v306
    %v395 = vpack.c.b16 %v315, %v311
    %v396 = vpack.c.b16 %v316, %v312
    %v397 = vpack.c.b16 %v317, %v313
    %v398 = vpack.c.b16 %v318, %v314
    %v399 = vpack.c.b16 %v323, %v319
    %v400 = vpack.c.b16 %v324, %v320
    %v401 = vpack.c.b16 %v325, %v321
    %v402 = vpack.c.b16 %v326, %v322
    %v403 = vpack.c.b16 %v331, %v327
    %v404 = vpack.c.b16 %v332, %v328
    %v405 = vpack.c.b16 %v333, %v329
    %v406 = vpack.c.b16 %v334, %v330
    %v407 = vpack.c.b16 %v339, %v335
    %v408 = vpack.c.b16 %v340, %v336
    %v409 = vpack.c.b16 %v341, %v337
    %v410 = vpack.c.b16 %v342, %v338
    %v411 = vpack.c.b16 %v347, %v343
    %v412 = vpack.c.b16 %v348, %v344
    %v413 = vpack.c.b16 %v349, %v345
    %v414 = vpack.c.b16 %v350, %v346
    %479 = vmatpush.bf16.msra.mxu0 %v379
    %480 = vmatpush.bf16.msra.mxu0 %v375
    %481 = vmatpush.bf16.msra.mxu0 %v371
    %482 = vmatpush.bf16.msra.mxu0 %v367
    %483 = vmatpush.bf16.msra.mxu0 %v363
    %484 = vmatpush.bf16.msra.mxu0 %v359
    %485 = vmatpush.bf16.msra.mxu0 %v355
    %486 = vmatpush.bf16.msra.mxu0 %v351
    %487 = vmatmul.bf16.gmra.mxu0 %v81
    %v488 = vpop.f32.mrf.mxu0
    %v489 = vadd.f32 %v151, %v488
    %v490 = vpop.f32.mrf.mxu0
    %491 = vdwg.mxu0
    %492 = vmatpush.bf16.msra.mxu0 %v411
    %493 = vmatpush.bf16.msra.mxu0 %v407
    %494 = vmatpush.bf16.msra.mxu0 %v403
    %495 = vmatpush.bf16.msra.mxu0 %v399
    %496 = vmatpush.bf16.msra.mxu0 %v395
    %497 = vmatpush.bf16.msra.mxu0 %v391
    %498 = vmatpush.bf16.msra.mxu0 %v387
    %499 = vmatpush.bf16.msra.mxu0 %v383
    %500 = vmatmul.bf16.gmra.mxu0 %v83
    %v501 = vpop.f32.mrf.mxu0
    %v502 = vadd.f32 %v489, %v501
    %v503 = vpop.f32.mrf.mxu0
    %504 = vdwg.mxu0
    %505 = vmatpush.bf16.msra.mxu0 %v380
    %506 = vmatpush.bf16.msra.mxu0 %v376
    %507 = vmatpush.bf16.msra.mxu0 %v372
    %508 = vmatpush.bf16.msra.mxu0 %v368
    %509 = vmatpush.bf16.msra.mxu0 %v364
    %510 = vmatpush.bf16.msra.mxu0 %v360
    %511 = vmatpush.bf16.msra.mxu0 %v356
    %512 = vmatpush.bf16.msra.mxu0 %v352
    %513 = vmatmul.bf16.gmra.mxu0 %v81
    %v514 = vpop.f32.mrf.mxu0
    %v515 = vadd.f32 %v152, %v514
    %v516 = vpop.f32.mrf.mxu0
    %517 = vdwg.mxu0
    %518 = vmatpush.bf16.msra.mxu0 %v412
    %519 = vmatpush.bf16.msra.mxu0 %v408
    %520 = vmatpush.bf16.msra.mxu0 %v404
    %521 = vmatpush.bf16.msra.mxu0 %v400
    %522 = vmatpush.bf16.msra.mxu0 %v396
    %523 = vmatpush.bf16.msra.mxu0 %v392
    %524 = vmatpush.bf16.msra.mxu0 %v388
    %525 = vmatpush.bf16.msra.mxu0 %v384
    %526 = vmatmul.bf16.gmra.mxu0 %v83
    %v527 = vpop.f32.mrf.mxu0
    %v528 = vadd.f32 %v515, %v527
    %v529 = vpop.f32.mrf.mxu0
    %530 = vdwg.mxu0
    %531 = vmatpush.bf16.msra.mxu0 %v381
    %532 = vmatpush.bf16.msra.mxu0 %v377
    %533 = vmatpush.bf16.msra.mxu0 %v373
    %534 = vmatpush.bf16.msra.mxu0 %v369
    %535 = vmatpush.bf16.msra.mxu0 %v365
    %536 = vmatpush.bf16.msra.mxu0 %v361
    %537 = vmatpush.bf16.msra.mxu0 %v357
    %538 = vmatpush.bf16.msra.mxu0 %v353
    %539 = vmatmul.bf16.gmra.mxu0 %v81
    %v540 = vpop.f32.mrf.mxu0
    %v541 = vadd.f32 %v153, %v540
    %v542 = vpop.f32.mrf.mxu0
    %543 = vdwg.mxu0
    %544 = vmatpush.bf16.msra.mxu0 %v413
    %545 = vmatpush.bf16.msra.mxu0 %v409
    %546 = vmatpush.bf16.msra.mxu0 %v405
    %547 = vmatpush.bf16.msra.mxu0 %v401
    %548 = vmatpush.bf16.msra.mxu0 %v397
    %549 = vmatpush.bf16.msra.mxu0 %v393
    %550 = vmatpush.bf16.msra.mxu0 %v389
    %551 = vmatpush.bf16.msra.mxu0 %v385
    %552 = vmatmul.bf16.gmra.mxu0 %v83
    %v553 = vpop.f32.mrf.mxu0
    %v554 = vadd.f32 %v541, %v553
    %v555 = vpop.f32.mrf.mxu0
    %556 = vdwg.mxu0
    %557 = vmatpush.bf16.msra.mxu0 %v382
    %558 = vmatpush.bf16.msra.mxu0 %v378
    %559 = vmatpush.bf16.msra.mxu0 %v374
    %560 = vmatpush.bf16.msra.mxu0 %v370
    %561 = vmatpush.bf16.msra.mxu0 %v366
    %562 = vmatpush.bf16.msra.mxu0 %v362
    %563 = vmatpush.bf16.msra.mxu0 %v358
    %564 = vmatpush.bf16.msra.mxu0 %v354
    %565 = vmatmul.bf16.gmra.mxu0 %v81
    %v566 = vpop.f32.mrf.mxu0
    %v567 = vadd.f32 %v154, %v566
    %v568 = vpop.f32.mrf.mxu0
    %569 = vdwg.mxu0
    %570 = vmatpush.bf16.msra.mxu0 %v414
    %571 = vmatpush.bf16.msra.mxu0 %v410
    %572 = vmatpush.bf16.msra.mxu0 %v406
    %573 = vmatpush.bf16.msra.mxu0 %v402
    %574 = vmatpush.bf16.msra.mxu0 %v398
    %575 = vmatpush.bf16.msra.mxu0 %v394
    %576 = vmatpush.bf16.msra.mxu0 %v390
    %577 = vmatpush.bf16.msra.mxu0 %v386
    %578 = vmatmul.bf16.gmra.mxu0 %v83
    %v579 = vpop.f32.mrf.mxu0
    %v580 = vadd.f32 %v567, %v579
    %v581 = vpop.f32.mrf.mxu0
    %582 = vdwg.mxu0
    %v583 = vxor.u32 %v502, 2147483648
    %v584 = vmul.f32 %v583, 1.442695
    %v585 = vpow.pop %v584
    %v586 = vadd.f32 %v585, 1.0
    %v587 = vrcp.pop %v586
    %v588 = vmul.f32 %v586, %v587
    %v589 = vsub.f32 1.0, %v588
    %v590 = vmul.f32 %v587, %v589
    %v591 = vadd.f32 %v587, %v590
    %vm592 = vweird.f32 %v586
    %vm593 = vweird.f32 %v587
    %vm594 = vmor %vm592, %vm593
    %v595 = vsel %vm594, %v587, %v591
    %v596 = vand.u32 2147483647, %v586
    %vm597 = vcmp.eq.f32.partialorder %v596, 8.507059e+37
    %v598 = vand.u32 %v586, 2147483648
    %v599 = vor.u32 1.1754944e-38, %v598
    %v600 = vsel %vm597, %v599, %v595
    %v601 = vmul.f32 1.0, %v600
    %v602 = vxor.u32 %v528, 2147483648
    %v603 = vmul.f32 %v602, 1.442695
    %v604 = vpow.pop %v603
    %v605 = vadd.f32 %v604, 1.0
    %v606 = vrcp.pop %v605
    %v607 = vmul.f32 %v605, %v606
    %v608 = vsub.f32 1.0, %v607
    %v609 = vmul.f32 %v606, %v608
    %v610 = vadd.f32 %v606, %v609
    %vm611 = vweird.f32 %v605
    %vm612 = vweird.f32 %v606
    %vm613 = vmor %vm611, %vm612
    %v614 = vsel %vm613, %v606, %v610
    %v615 = vand.u32 2147483647, %v605
    %vm616 = vcmp.eq.f32.partialorder %v615, 8.507059e+37
    %v617 = vand.u32 %v605, 2147483648
    %v618 = vor.u32 1.1754944e-38, %v617
    %v619 = vsel %vm616, %v618, %v614
    %v620 = vmul.f32 1.0, %v619
    %v621 = vtanh.pop %v554
    %v622 = vxor.u32 %v580, 2147483648
    %v623 = vmul.f32 %v622, 1.442695
    %v624 = vpow.pop %v623
    %v625 = vadd.f32 %v624, 1.0
    %v626 = vrcp.pop %v625
    %v627 = vmul.f32 %v625, %v626
    %v628 = vsub.f32 1.0, %v627
    %v629 = vmul.f32 %v626, %v628
    %v630 = vadd.f32 %v626, %v629
    %vm631 = vweird.f32 %v625
    %vm632 = vweird.f32 %v626
    %vm633 = vmor %vm631, %vm632
    %v634 = vsel %vm633, %v626, %v630
    %v635 = vand.u32 2147483647, %v625
    %vm636 = vcmp.eq.f32.partialorder %v635, 8.507059e+37
    %v637 = vand.u32 %v625, 2147483648
    %v638 = vor.u32 1.1754944e-38, %v637
    %v639 = vsel %vm636, %v638, %v634
    %v640 = vmul.f32 1.0, %v639
    %v641 = vmul.f32 %v620, %v84
    %v642 = vmul.f32 %v601, %v621
    %v643 = vadd.f32 %v641, %v642
    %v644 = vtanh.pop %v643
    %v645 = vmul.f32 %v640, %v644
    %v646 = vpack.c.bf16 %v645, %v645
    %s647 = scalar_lea.vmem %s1, 8
    %v648 = vld [vmem:[%s647] sm:$0xff]
    %v649 = vpack.c.bf16 %v648, %v648
    %s650 = scalar_lea.vmem %s2, 8
    %v651 = vld [vmem:[%s650] sm:$0xff]
    %v652 = vld [vmem:[#allocation4] sm:$0xff]
    %v653 = vld [vmem:[#allocation4 + $0x8] sm:$0xff]
    %v654 = vld [vmem:[#allocation4 + $0x10] sm:$0xff]
    %v655 = vld [vmem:[#allocation4 + $0x18] sm:$0xff]
    %v656 = vld [vmem:[#allocation4 + $0x20] sm:$0xff]
    %v657 = vld [vmem:[#allocation4 + $0x28] sm:$0xff]
    %v658 = vld [vmem:[#allocation4 + $0x30] sm:$0xff]
    %v659 = vld [vmem:[#allocation4 + $0x38] sm:$0xff]
    %v660 = vld [vmem:[#allocation4 + $0x40] sm:$0xff]
    %v661 = vld [vmem:[#allocation4 + $0x48] sm:$0xff]
    %v662 = vld [vmem:[#allocation4 + $0x50] sm:$0xff]
    %v663 = vld [vmem:[#allocation4 + $0x58] sm:$0xff]
    %v664 = vld [vmem:[#allocation4 + $0x60] sm:$0xff]
    %v665 = vld [vmem:[#allocation4 + $0x68] sm:$0xff]
    %v666 = vld [vmem:[#allocation4 + $0x70] sm:$0xff]
    %v667 = vld [vmem:[#allocation4 + $0x78] sm:$0xff]
    %v668 = vld [vmem:[#allocation4 + $0x80] sm:$0xff]
    %v669 = vld [vmem:[#allocation4 + $0x88] sm:$0xff]
    %v670 = vld [vmem:[#allocation4 + $0x90] sm:$0xff]
    %v671 = vld [vmem:[#allocation4 + $0x98] sm:$0xff]
    %v672 = vld [vmem:[#allocation4 + $0xa0] sm:$0xff]
    %v673 = vld [vmem:[#allocation4 + $0xa8] sm:$0xff]
    %v674 = vld [vmem:[#allocation4 + $0xb0] sm:$0xff]
    %v675 = vld [vmem:[#allocation4 + $0xb8] sm:$0xff]
    %v676 = vld [vmem:[#allocation4 + $0xc0] sm:$0xff]
    %v677 = vld [vmem:[#allocation4 + $0xc8] sm:$0xff]
    %v678 = vld [vmem:[#allocation4 + $0xd0] sm:$0xff]
    %v679 = vld [vmem:[#allocation4 + $0xd8] sm:$0xff]
    %v680 = vld [vmem:[#allocation4 + $0xe0] sm:$0xff]
    %v681 = vld [vmem:[#allocation4 + $0xe8] sm:$0xff]
    %v682 = vld [vmem:[#allocation4 + $0xf0] sm:$0xff]
    %v683 = vld [vmem:[#allocation4 + $0xf8] sm:$0xff]
    %v684 = vld [vmem:[#allocation4 + $0x100] sm:$0xff]
    %v685 = vld [vmem:[#allocation4 + $0x108] sm:$0xff]
    %v686 = vld [vmem:[#allocation4 + $0x110] sm:$0xff]
    %v687 = vld [vmem:[#allocation4 + $0x118] sm:$0xff]
    %v688 = vld [vmem:[#allocation4 + $0x120] sm:$0xff]
    %v689 = vld [vmem:[#allocation4 + $0x128] sm:$0xff]
    %v690 = vld [vmem:[#allocation4 + $0x130] sm:$0xff]
    %v691 = vld [vmem:[#allocation4 + $0x138] sm:$0xff]
    %v692 = vld [vmem:[#allocation4 + $0x140] sm:$0xff]
    %v693 = vld [vmem:[#allocation4 + $0x148] sm:$0xff]
    %v694 = vld [vmem:[#allocation4 + $0x150] sm:$0xff]
    %v695 = vld [vmem:[#allocation4 + $0x158] sm:$0xff]
    %v696 = vld [vmem:[#allocation4 + $0x160] sm:$0xff]
    %v697 = vld [vmem:[#allocation4 + $0x168] sm:$0xff]
    %v698 = vld [vmem:[#allocation4 + $0x170] sm:$0xff]
    %v699 = vld [vmem:[#allocation4 + $0x178] sm:$0xff]
    %v700 = vld [vmem:[#allocation4 + $0x180] sm:$0xff]
    %v701 = vld [vmem:[#allocation4 + $0x188] sm:$0xff]
    %v702 = vld [vmem:[#allocation4 + $0x190] sm:$0xff]
    %v703 = vld [vmem:[#allocation4 + $0x198] sm:$0xff]
    %v704 = vld [vmem:[#allocation4 + $0x1a0] sm:$0xff]
    %v705 = vld [vmem:[#allocation4 + $0x1a8] sm:$0xff]
    %v706 = vld [vmem:[#allocation4 + $0x1b0] sm:$0xff]
    %v707 = vld [vmem:[#allocation4 + $0x1b8] sm:$0xff]
    %v708 = vld [vmem:[#allocation4 + $0x1c0] sm:$0xff]
    %v709 = vld [vmem:[#allocation4 + $0x1c8] sm:$0xff]
    %v710 = vld [vmem:[#allocation4 + $0x1d0] sm:$0xff]
    %v711 = vld [vmem:[#allocation4 + $0x1d8] sm:$0xff]
    %v712 = vld [vmem:[#allocation4 + $0x1e0] sm:$0xff]
    %v713 = vld [vmem:[#allocation4 + $0x1e8] sm:$0xff]
    %v714 = vld [vmem:[#allocation4 + $0x1f0] sm:$0xff]
    %v715 = vld [vmem:[#allocation4 + $0x1f8] sm:$0xff]
    %v716 = vld [vmem:[%s7] sm:$0xf]
    %v718 = vperm.slane %v716, 0
    %v719 = vperm.slane %v716, 1
    %v720 = vperm.slane %v716, 2
    %v721 = vperm.slane %v716, 3
    %v790 = vunpack.c.l.b16 %v652
    %v791 = vunpack.c.h.b16 %v652
    %v792 = vunpack.c.l.b16 %v653
    %v793 = vunpack.c.h.b16 %v653
    %v794 = vunpack.c.l.b16 %v654
    %v795 = vunpack.c.h.b16 %v654
    %v796 = vunpack.c.l.b16 %v655
    %v797 = vunpack.c.h.b16 %v655
    %v798 = vunpack.c.l.b16 %v656
    %v799 = vunpack.c.h.b16 %v656
    %v800 = vunpack.c.l.b16 %v657
    %v801 = vunpack.c.h.b16 %v657
    %v802 = vunpack.c.l.b16 %v658
    %v803 = vunpack.c.h.b16 %v658
    %v804 = vunpack.c.l.b16 %v659
    %v805 = vunpack.c.h.b16 %v659
    %v806 = vunpack.c.l.b16 %v660
    %v807 = vunpack.c.h.b16 %v660
    %v808 = vunpack.c.l.b16 %v661
    %v809 = vunpack.c.h.b16 %v661
    %v810 = vunpack.c.l.b16 %v662
    %v811 = vunpack.c.h.b16 %v662
    %v812 = vunpack.c.l.b16 %v663
    %v813 = vunpack.c.h.b16 %v663
    %v814 = vunpack.c.l.b16 %v664
    %v815 = vunpack.c.h.b16 %v664
    %v816 = vunpack.c.l.b16 %v665
    %v817 = vunpack.c.h.b16 %v665
    %v818 = vunpack.c.l.b16 %v666
    %v819 = vunpack.c.h.b16 %v666
    %v820 = vunpack.c.l.b16 %v667
    %v821 = vunpack.c.h.b16 %v667
    %v822 = vunpack.c.l.b16 %v668
    %v823 = vunpack.c.h.b16 %v668
    %v824 = vunpack.c.l.b16 %v669
    %v825 = vunpack.c.h.b16 %v669
    %v826 = vunpack.c.l.b16 %v670
    %v827 = vunpack.c.h.b16 %v670
    %v828 = vunpack.c.l.b16 %v671
    %v829 = vunpack.c.h.b16 %v671
    %v830 = vunpack.c.l.b16 %v672
    %v831 = vunpack.c.h.b16 %v672
    %v832 = vunpack.c.l.b16 %v673
    %v833 = vunpack.c.h.b16 %v673
    %v834 = vunpack.c.l.b16 %v674
    %v835 = vunpack.c.h.b16 %v674
    %v836 = vunpack.c.l.b16 %v675
    %v837 = vunpack.c.h.b16 %v675
    %v838 = vunpack.c.l.b16 %v676
    %v839 = vunpack.c.h.b16 %v676
    %v840 = vunpack.c.l.b16 %v677
    %v841 = vunpack.c.h.b16 %v677
    %v842 = vunpack.c.l.b16 %v678
    %v843 = vunpack.c.h.b16 %v678
    %v844 = vunpack.c.l.b16 %v679
    %v845 = vunpack.c.h.b16 %v679
    %v846 = vunpack.c.l.b16 %v680
    %v847 = vunpack.c.h.b16 %v680
    %v848 = vunpack.c.l.b16 %v681
    %v849 = vunpack.c.h.b16 %v681
    %v850 = vunpack.c.l.b16 %v682
    %v851 = vunpack.c.h.b16 %v682
    %v852 = vunpack.c.l.b16 %v683
    %v853 = vunpack.c.h.b16 %v683
    %v854 = vunpack.c.l.b16 %v684
    %v855 = vunpack.c.h.b16 %v684
    %v856 = vunpack.c.l.b16 %v685
    %v857 = vunpack.c.h.b16 %v685
    %v858 = vunpack.c.l.b16 %v686
    %v859 = vunpack.c.h.b16 %v686
    %v860 = vunpack.c.l.b16 %v687
    %v861 = vunpack.c.h.b16 %v687
    %v862 = vunpack.c.l.b16 %v688
    %v863 = vunpack.c.h.b16 %v688
    %v864 = vunpack.c.l.b16 %v689
    %v865 = vunpack.c.h.b16 %v689
    %v866 = vunpack.c.l.b16 %v690
    %v867 = vunpack.c.h.b16 %v690
    %v868 = vunpack.c.l.b16 %v691
    %v869 = vunpack.c.h.b16 %v691
    %v870 = vunpack.c.l.b16 %v692
    %v871 = vunpack.c.h.b16 %v692
    %v872 = vunpack.c.l.b16 %v693
    %v873 = vunpack.c.h.b16 %v693
    %v874 = vunpack.c.l.b16 %v694
    %v875 = vunpack.c.h.b16 %v694
    %v876 = vunpack.c.l.b16 %v695
    %v877 = vunpack.c.h.b16 %v695
    %v878 = vunpack.c.l.b16 %v696
    %v879 = vunpack.c.h.b16 %v696
    %v880 = vunpack.c.l.b16 %v697
    %v881 = vunpack.c.h.b16 %v697
    %v882 = vunpack.c.l.b16 %v698
    %v883 = vunpack.c.h.b16 %v698
    %v884 = vunpack.c.l.b16 %v699
    %v885 = vunpack.c.h.b16 %v699
    %v886 = vunpack.c.l.b16 %v700
    %v887 = vunpack.c.h.b16 %v700
    %v888 = vunpack.c.l.b16 %v701
    %v889 = vunpack.c.h.b16 %v701
    %v890 = vunpack.c.l.b16 %v702
    %v891 = vunpack.c.h.b16 %v702
    %v892 = vunpack.c.l.b16 %v703
    %v893 = vunpack.c.h.b16 %v703
    %v894 = vunpack.c.l.b16 %v704
    %v895 = vunpack.c.h.b16 %v704
    %v896 = vunpack.c.l.b16 %v705
    %v897 = vunpack.c.h.b16 %v705
    %v898 = vunpack.c.l.b16 %v706
    %v899 = vunpack.c.h.b16 %v706
    %v900 = vunpack.c.l.b16 %v707
    %v901 = vunpack.c.h.b16 %v707
    %v902 = vunpack.c.l.b16 %v708
    %v903 = vunpack.c.h.b16 %v708
    %v904 = vunpack.c.l.b16 %v709
    %v905 = vunpack.c.h.b16 %v709
    %v906 = vunpack.c.l.b16 %v710
    %v907 = vunpack.c.h.b16 %v710
    %v908 = vunpack.c.l.b16 %v711
    %v909 = vunpack.c.h.b16 %v711
    %v910 = vunpack.c.l.b16 %v712
    %v911 = vunpack.c.h.b16 %v712
    %v912 = vunpack.c.l.b16 %v713
    %v913 = vunpack.c.h.b16 %v713
    %v914 = vunpack.c.l.b16 %v714
    %v915 = vunpack.c.h.b16 %v714
    %v916 = vunpack.c.l.b16 %v715
    %v917 = vunpack.c.h.b16 %v715
    %v918 = vpack.c.b16 %v794, %v790
    %v919 = vpack.c.b16 %v795, %v791
    %v920 = vpack.c.b16 %v796, %v792
    %v921 = vpack.c.b16 %v797, %v793
    %v922 = vpack.c.b16 %v802, %v798
    %v923 = vpack.c.b16 %v803, %v799
    %v924 = vpack.c.b16 %v804, %v800
    %v925 = vpack.c.b16 %v805, %v801
    %v926 = vpack.c.b16 %v810, %v806
    %v927 = vpack.c.b16 %v811, %v807
    %v928 = vpack.c.b16 %v812, %v808
    %v929 = vpack.c.b16 %v813, %v809
    %v930 = vpack.c.b16 %v818, %v814
    %v931 = vpack.c.b16 %v819, %v815
    %v932 = vpack.c.b16 %v820, %v816
    %v933 = vpack.c.b16 %v821, %v817
    %v934 = vpack.c.b16 %v826, %v822
    %v935 = vpack.c.b16 %v827, %v823
    %v936 = vpack.c.b16 %v828, %v824
    %v937 = vpack.c.b16 %v829, %v825
    %v938 = vpack.c.b16 %v834, %v830
    %v939 = vpack.c.b16 %v835, %v831
    %v940 = vpack.c.b16 %v836, %v832
    %v941 = vpack.c.b16 %v837, %v833
    %v942 = vpack.c.b16 %v842, %v838
    %v943 = vpack.c.b16 %v843, %v839
    %v944 = vpack.c.b16 %v844, %v840
    %v945 = vpack.c.b16 %v845, %v841
    %v946 = vpack.c.b16 %v850, %v846
    %v947 = vpack.c.b16 %v851, %v847
    %v948 = vpack.c.b16 %v852, %v848
    %v949 = vpack.c.b16 %v853, %v849
    %v950 = vpack.c.b16 %v858, %v854
    %v951 = vpack.c.b16 %v859, %v855
    %v952 = vpack.c.b16 %v860, %v856
    %v953 = vpack.c.b16 %v861, %v857
    %v954 = vpack.c.b16 %v866, %v862
    %v955 = vpack.c.b16 %v867, %v863
    %v956 = vpack.c.b16 %v868, %v864
    %v957 = vpack.c.b16 %v869, %v865
    %v958 = vpack.c.b16 %v874, %v870
    %v959 = vpack.c.b16 %v875, %v871
    %v960 = vpack.c.b16 %v876, %v872
    %v961 = vpack.c.b16 %v877, %v873
    %v962 = vpack.c.b16 %v882, %v878
    %v963 = vpack.c.b16 %v883, %v879
    %v964 = vpack.c.b16 %v884, %v880
    %v965 = vpack.c.b16 %v885, %v881
    %v966 = vpack.c.b16 %v890, %v886
    %v967 = vpack.c.b16 %v891, %v887
    %v968 = vpack.c.b16 %v892, %v888
    %v969 = vpack.c.b16 %v893, %v889
    %v970 = vpack.c.b16 %v898, %v894
    %v971 = vpack.c.b16 %v899, %v895
    %v972 = vpack.c.b16 %v900, %v896
    %v973 = vpack.c.b16 %v901, %v897
    %v974 = vpack.c.b16 %v906, %v902
    %v975 = vpack.c.b16 %v907, %v903
    %v976 = vpack.c.b16 %v908, %v904
    %v977 = vpack.c.b16 %v909, %v905
    %v978 = vpack.c.b16 %v914, %v910
    %v979 = vpack.c.b16 %v915, %v911
    %v980 = vpack.c.b16 %v916, %v912
    %v981 = vpack.c.b16 %v917, %v913
    %1046 = vmatpush.bf16.msra.mxu0 %v946
    %1047 = vmatpush.bf16.msra.mxu0 %v942
    %1048 = vmatpush.bf16.msra.mxu0 %v938
    %1049 = vmatpush.bf16.msra.mxu0 %v934
    %1050 = vmatpush.bf16.msra.mxu0 %v930
    %1051 = vmatpush.bf16.msra.mxu0 %v926
    %1052 = vmatpush.bf16.msra.mxu0 %v922
    %1053 = vmatpush.bf16.msra.mxu0 %v918
    %1054 = vmatmul.bf16.gmra.mxu0 %v646
    %v1055 = vpop.f32.mrf.mxu0
    %v1056 = vadd.f32 %v718, %v1055
    %v1057 = vpop.f32.mrf.mxu0
    %1058 = vdwg.mxu0
    %1059 = vmatpush.bf16.msra.mxu0 %v978
    %1060 = vmatpush.bf16.msra.mxu0 %v974
    %1061 = vmatpush.bf16.msra.mxu0 %v970
    %1062 = vmatpush.bf16.msra.mxu0 %v966
    %1063 = vmatpush.bf16.msra.mxu0 %v962
    %1064 = vmatpush.bf16.msra.mxu0 %v958
    %1065 = vmatpush.bf16.msra.mxu0 %v954
    %1066 = vmatpush.bf16.msra.mxu0 %v950
    %1067 = vmatmul.bf16.gmra.mxu0 %v649
    %v1068 = vpop.f32.mrf.mxu0
    %v1069 = vadd.f32 %v1056, %v1068
    %v1070 = vpop.f32.mrf.mxu0
    %1071 = vdwg.mxu0
    %1072 = vmatpush.bf16.msra.mxu0 %v947
    %1073 = vmatpush.bf16.msra.mxu0 %v943
    %1074 = vmatpush.bf16.msra.mxu0 %v939
    %1075 = vmatpush.bf16.msra.mxu0 %v935
    %1076 = vmatpush.bf16.msra.mxu0 %v931
    %1077 = vmatpush.bf16.msra.mxu0 %v927
    %1078 = vmatpush.bf16.msra.mxu0 %v923
    %1079 = vmatpush.bf16.msra.mxu0 %v919
    %1080 = vmatmul.bf16.gmra.mxu0 %v646
    %v1081 = vpop.f32.mrf.mxu0
    %v1082 = vadd.f32 %v719, %v1081
    %v1083 = vpop.f32.mrf.mxu0
    %1084 = vdwg.mxu0
    %1085 = vmatpush.bf16.msra.mxu0 %v979
    %1086 = vmatpush.bf16.msra.mxu0 %v975
    %1087 = vmatpush.bf16.msra.mxu0 %v971
    %1088 = vmatpush.bf16.msra.mxu0 %v967
    %1089 = vmatpush.bf16.msra.mxu0 %v963
    %1090 = vmatpush.bf16.msra.mxu0 %v959
    %1091 = vmatpush.bf16.msra.mxu0 %v955
    %1092 = vmatpush.bf16.msra.mxu0 %v951
    %1093 = vmatmul.bf16.gmra.mxu0 %v649
    %v1094 = vpop.f32.mrf.mxu0
    %v1095 = vadd.f32 %v1082, %v1094
    %v1096 = vpop.f32.mrf.mxu0
    %1097 = vdwg.mxu0
    %1098 = vmatpush.bf16.msra.mxu0 %v948
    %1099 = vmatpush.bf16.msra.mxu0 %v944
    %1100 = vmatpush.bf16.msra.mxu0 %v940
    %1101 = vmatpush.bf16.msra.mxu0 %v936
    %1102 = vmatpush.bf16.msra.mxu0 %v932
    %1103 = vmatpush.bf16.msra.mxu0 %v928
    %1104 = vmatpush.bf16.msra.mxu0 %v924
    %1105 = vmatpush.bf16.msra.mxu0 %v920
    %1106 = vmatmul.bf16.gmra.mxu0 %v646
    %v1107 = vpop.f32.mrf.mxu0
    %v1108 = vadd.f32 %v720, %v1107
    %v1109 = vpop.f32.mrf.mxu0
    %1110 = vdwg.mxu0
    %1111 = vmatpush.bf16.msra.mxu0 %v980
    %1112 = vmatpush.bf16.msra.mxu0 %v976
    %1113 = vmatpush.bf16.msra.mxu0 %v972
    %1114 = vmatpush.bf16.msra.mxu0 %v968
    %1115 = vmatpush.bf16.msra.mxu0 %v964
    %1116 = vmatpush.bf16.msra.mxu0 %v960
    %1117 = vmatpush.bf16.msra.mxu0 %v956
    %1118 = vmatpush.bf16.msra.mxu0 %v952
    %1119 = vmatmul.bf16.gmra.mxu0 %v649
    %v1120 = vpop.f32.mrf.mxu0
    %v1121 = vadd.f32 %v1108, %v1120
    %v1122 = vpop.f32.mrf.mxu0
    %1123 = vdwg.mxu0
    %1124 = vmatpush.bf16.msra.mxu0 %v949
    %1125 = vmatpush.bf16.msra.mxu0 %v945
    %1126 = vmatpush.bf16.msra.mxu0 %v941
    %1127 = vmatpush.bf16.msra.mxu0 %v937
    %1128 = vmatpush.bf16.msra.mxu0 %v933
    %1129 = vmatpush.bf16.msra.mxu0 %v929
    %1130 = vmatpush.bf16.msra.mxu0 %v925
    %1131 = vmatpush.bf16.msra.mxu0 %v921
    %1132 = vmatmul.bf16.gmra.mxu0 %v646
    %v1133 = vpop.f32.mrf.mxu0
    %v1134 = vadd.f32 %v721, %v1133
    %v1135 = vpop.f32.mrf.mxu0
    %1136 = vdwg.mxu0
    %1137 = vmatpush.bf16.msra.mxu0 %v981
    %1138 = vmatpush.bf16.msra.mxu0 %v977
    %1139 = vmatpush.bf16.msra.mxu0 %v973
    %1140 = vmatpush.bf16.msra.mxu0 %v969
    %1141 = vmatpush.bf16.msra.mxu0 %v965
    %1142 = vmatpush.bf16.msra.mxu0 %v961
    %1143 = vmatpush.bf16.msra.mxu0 %v957
    %1144 = vmatpush.bf16.msra.mxu0 %v953
    %1145 = vmatmul.bf16.gmra.mxu0 %v649
    %v1146 = vpop.f32.mrf.mxu0
    %v1147 = vadd.f32 %v1134, %v1146
    %v1148 = vpop.f32.mrf.mxu0
    %1149 = vdwg.mxu0
    %v1150 = vxor.u32 %v1069, 2147483648
    %v1151 = vmul.f32 %v1150, 1.442695
    %v1152 = vpow.pop %v1151
    %v1153 = vadd.f32 %v1152, 1.0
    %v1154 = vrcp.pop %v1153
    %v1155 = vmul.f32 %v1153, %v1154
    %v1156 = vsub.f32 1.0, %v1155
    %v1157 = vmul.f32 %v1154, %v1156
    %v1158 = vadd.f32 %v1154, %v1157
    %vm1159 = vweird.f32 %v1153
    %vm1160 = vweird.f32 %v1154
    %vm1161 = vmor %vm1159, %vm1160
    %v1162 = vsel %vm1161, %v1154, %v1158
    %v1163 = vand.u32 2147483647, %v1153
    %vm1164 = vcmp.eq.f32.partialorder %v1163, 8.507059e+37
    %v1165 = vand.u32 %v1153, 2147483648
    %v1166 = vor.u32 1.1754944e-38, %v1165
    %v1167 = vsel %vm1164, %v1166, %v1162
    %v1168 = vmul.f32 1.0, %v1167
    %v1169 = vxor.u32 %v1095, 2147483648
    %v1170 = vmul.f32 %v1169, 1.442695
    %v1171 = vpow.pop %v1170
    %v1172 = vadd.f32 %v1171, 1.0
    %v1173 = vrcp.pop %v1172
    %v1174 = vmul.f32 %v1172, %v1173
    %v1175 = vsub.f32 1.0, %v1174
    %v1176 = vmul.f32 %v1173, %v1175
    %v1177 = vadd.f32 %v1173, %v1176
    %vm1178 = vweird.f32 %v1172
    %vm1179 = vweird.f32 %v1173
    %vm1180 = vmor %vm1178, %vm1179
    %v1181 = vsel %vm1180, %v1173, %v1177
    %v1182 = vand.u32 2147483647, %v1172
    %vm1183 = vcmp.eq.f32.partialorder %v1182, 8.507059e+37
    %v1184 = vand.u32 %v1172, 2147483648
    %v1185 = vor.u32 1.1754944e-38, %v1184
    %v1186 = vsel %vm1183, %v1185, %v1181
    %v1187 = vmul.f32 1.0, %v1186
    %v1188 = vtanh.pop %v1121
    %v1189 = vxor.u32 %v1147, 2147483648
    %v1190 = vmul.f32 %v1189, 1.442695
    %v1191 = vpow.pop %v1190
    %v1192 = vadd.f32 %v1191, 1.0
    %v1193 = vrcp.pop %v1192
    %v1194 = vmul.f32 %v1192, %v1193
    %v1195 = vsub.f32 1.0, %v1194
    %v1196 = vmul.f32 %v1193, %v1195
    %v1197 = vadd.f32 %v1193, %v1196
    %vm1198 = vweird.f32 %v1192
    %vm1199 = vweird.f32 %v1193
    %vm1200 = vmor %vm1198, %vm1199
    %v1201 = vsel %vm1200, %v1193, %v1197
    %v1202 = vand.u32 2147483647, %v1192
    %vm1203 = vcmp.eq.f32.partialorder %v1202, 8.507059e+37
    %v1204 = vand.u32 %v1192, 2147483648
    %v1205 = vor.u32 1.1754944e-38, %v1204
    %v1206 = vsel %vm1203, %v1205, %v1201
    %v1207 = vmul.f32 1.0, %v1206
    %v1208 = vmul.f32 %v1187, %v651
    %v1209 = vmul.f32 %v1168, %v1188
    %v1210 = vadd.f32 %v1208, %v1209
    %v1211 = vtanh.pop %v1210
    %v1212 = vmul.f32 %v1207, %v1211
    %v1213 = vpack.c.bf16 %v1212, %v1212
    %s1214 = scalar_lea.vmem %s1, 16
    %v1215 = vld [vmem:[%s1214] sm:$0xff]
    %v1216 = vpack.c.bf16 %v1215, %v1215
    %s1217 = scalar_lea.vmem %s2, 16
    %v1218 = vld [vmem:[%s1217] sm:$0xff]
    %v1219 = vld [vmem:[#allocation6] sm:$0xff]
    %v1220 = vld [vmem:[#allocation6 + $0x8] sm:$0xff]
    %v1221 = vld [vmem:[#allocation6 + $0x10] sm:$0xff]
    %v1222 = vld [vmem:[#allocation6 + $0x18] sm:$0xff]
    %v1223 = vld [vmem:[#allocation6 + $0x20] sm:$0xff]
    %v1224 = vld [vmem:[#allocation6 + $0x28] sm:$0xff]
    %v1225 = vld [vmem:[#allocation6 + $0x30] sm:$0xff]
    %v1226 = vld [vmem:[#allocation6 + $0x38] sm:$0xff]
    %v1227 = vld [vmem:[#allocation6 + $0x40] sm:$0xff]
    %v1228 = vld [vmem:[#allocation6 + $0x48] sm:$0xff]
    %v1229 = vld [vmem:[#allocation6 + $0x50] sm:$0xff]
    %v1230 = vld [vmem:[#allocation6 + $0x58] sm:$0xff]
    %v1231 = vld [vmem:[#allocation6 + $0x60] sm:$0xff]
    %v1232 = vld [vmem:[#allocation6 + $0x68] sm:$0xff]
    %v1233 = vld [vmem:[#allocation6 + $0x70] sm:$0xff]
    %v1234 = vld [vmem:[#allocation6 + $0x78] sm:$0xff]
    %v1235 = vld [vmem:[#allocation6 + $0x80] sm:$0xff]
    %v1236 = vld [vmem:[#allocation6 + $0x88] sm:$0xff]
    %v1237 = vld [vmem:[#allocation6 + $0x90] sm:$0xff]
    %v1238 = vld [vmem:[#allocation6 + $0x98] sm:$0xff]
    %v1239 = vld [vmem:[#allocation6 + $0xa0] sm:$0xff]
    %v1240 = vld [vmem:[#allocation6 + $0xa8] sm:$0xff]
    %v1241 = vld [vmem:[#allocation6 + $0xb0] sm:$0xff]
    %v1242 = vld [vmem:[#allocation6 + $0xb8] sm:$0xff]
    %v1243 = vld [vmem:[#allocation6 + $0xc0] sm:$0xff]
    %v1244 = vld [vmem:[#allocation6 + $0xc8] sm:$0xff]
    %v1245 = vld [vmem:[#allocation6 + $0xd0] sm:$0xff]
    %v1246 = vld [vmem:[#allocation6 + $0xd8] sm:$0xff]
    %v1247 = vld [vmem:[#allocation6 + $0xe0] sm:$0xff]
    %v1248 = vld [vmem:[#allocation6 + $0xe8] sm:$0xff]
    %v1249 = vld [vmem:[#allocation6 + $0xf0] sm:$0xff]
    %v1250 = vld [vmem:[#allocation6 + $0xf8] sm:$0xff]
    %v1251 = vld [vmem:[#allocation6 + $0x100] sm:$0xff]
    %v1252 = vld [vmem:[#allocation6 + $0x108] sm:$0xff]
    %v1253 = vld [vmem:[#allocation6 + $0x110] sm:$0xff]
    %v1254 = vld [vmem:[#allocation6 + $0x118] sm:$0xff]
    %v1255 = vld [vmem:[#allocation6 + $0x120] sm:$0xff]
    %v1256 = vld [vmem:[#allocation6 + $0x128] sm:$0xff]
    %v1257 = vld [vmem:[#allocation6 + $0x130] sm:$0xff]
    %v1258 = vld [vmem:[#allocation6 + $0x138] sm:$0xff]
    %v1259 = vld [vmem:[#allocation6 + $0x140] sm:$0xff]
    %v1260 = vld [vmem:[#allocation6 + $0x148] sm:$0xff]
    %v1261 = vld [vmem:[#allocation6 + $0x150] sm:$0xff]
    %v1262 = vld [vmem:[#allocation6 + $0x158] sm:$0xff]
    %v1263 = vld [vmem:[#allocation6 + $0x160] sm:$0xff]
    %v1264 = vld [vmem:[#allocation6 + $0x168] sm:$0xff]
    %v1265 = vld [vmem:[#allocation6 + $0x170] sm:$0xff]
    %v1266 = vld [vmem:[#allocation6 + $0x178] sm:$0xff]
    %v1267 = vld [vmem:[#allocation6 + $0x180] sm:$0xff]
    %v1268 = vld [vmem:[#allocation6 + $0x188] sm:$0xff]
    %v1269 = vld [vmem:[#allocation6 + $0x190] sm:$0xff]
    %v1270 = vld [vmem:[#allocation6 + $0x198] sm:$0xff]
    %v1271 = vld [vmem:[#allocation6 + $0x1a0] sm:$0xff]
    %v1272 = vld [vmem:[#allocation6 + $0x1a8] sm:$0xff]
    %v1273 = vld [vmem:[#allocation6 + $0x1b0] sm:$0xff]
    %v1274 = vld [vmem:[#allocation6 + $0x1b8] sm:$0xff]
    %v1275 = vld [vmem:[#allocation6 + $0x1c0] sm:$0xff]
    %v1276 = vld [vmem:[#allocation6 + $0x1c8] sm:$0xff]
    %v1277 = vld [vmem:[#allocation6 + $0x1d0] sm:$0xff]
    %v1278 = vld [vmem:[#allocation6 + $0x1d8] sm:$0xff]
    %v1279 = vld [vmem:[#allocation6 + $0x1e0] sm:$0xff]
    %v1280 = vld [vmem:[#allocation6 + $0x1e8] sm:$0xff]
    %v1281 = vld [vmem:[#allocation6 + $0x1f0] sm:$0xff]
    %v1282 = vld [vmem:[#allocation6 + $0x1f8] sm:$0xff]
    %v1283 = vld [vmem:[%s8] sm:$0xf]
    %v1285 = vperm.slane %v1283, 0
    %v1286 = vperm.slane %v1283, 1
    %v1287 = vperm.slane %v1283, 2
    %v1288 = vperm.slane %v1283, 3
    %v1357 = vunpack.c.l.b16 %v1219
    %v1358 = vunpack.c.h.b16 %v1219
    %v1359 = vunpack.c.l.b16 %v1220
    %v1360 = vunpack.c.h.b16 %v1220
    %v1361 = vunpack.c.l.b16 %v1221
    %v1362 = vunpack.c.h.b16 %v1221
    %v1363 = vunpack.c.l.b16 %v1222
    %v1364 = vunpack.c.h.b16 %v1222
    %v1365 = vunpack.c.l.b16 %v1223
    %v1366 = vunpack.c.h.b16 %v1223
    %v1367 = vunpack.c.l.b16 %v1224
    %v1368 = vunpack.c.h.b16 %v1224
    %v1369 = vunpack.c.l.b16 %v1225
    %v1370 = vunpack.c.h.b16 %v1225
    %v1371 = vunpack.c.l.b16 %v1226
    %v1372 = vunpack.c.h.b16 %v1226
    %v1373 = vunpack.c.l.b16 %v1227
    %v1374 = vunpack.c.h.b16 %v1227
    %v1375 = vunpack.c.l.b16 %v1228
    %v1376 = vunpack.c.h.b16 %v1228
    %v1377 = vunpack.c.l.b16 %v1229
    %v1378 = vunpack.c.h.b16 %v1229
    %v1379 = vunpack.c.l.b16 %v1230
    %v1380 = vunpack.c.h.b16 %v1230
    %v1381 = vunpack.c.l.b16 %v1231
    %v1382 = vunpack.c.h.b16 %v1231
    %v1383 = vunpack.c.l.b16 %v1232
    %v1384 = vunpack.c.h.b16 %v1232
    %v1385 = vunpack.c.l.b16 %v1233
    %v1386 = vunpack.c.h.b16 %v1233
    %v1387 = vunpack.c.l.b16 %v1234
    %v1388 = vunpack.c.h.b16 %v1234
    %v1389 = vunpack.c.l.b16 %v1235
    %v1390 = vunpack.c.h.b16 %v1235
    %v1391 = vunpack.c.l.b16 %v1236
    %v1392 = vunpack.c.h.b16 %v1236
    %v1393 = vunpack.c.l.b16 %v1237
    %v1394 = vunpack.c.h.b16 %v1237
    %v1395 = vunpack.c.l.b16 %v1238
    %v1396 = vunpack.c.h.b16 %v1238
    %v1397 = vunpack.c.l.b16 %v1239
    %v1398 = vunpack.c.h.b16 %v1239
    %v1399 = vunpack.c.l.b16 %v1240
    %v1400 = vunpack.c.h.b16 %v1240
    %v1401 = vunpack.c.l.b16 %v1241
    %v1402 = vunpack.c.h.b16 %v1241
    %v1403 = vunpack.c.l.b16 %v1242
    %v1404 = vunpack.c.h.b16 %v1242
    %v1405 = vunpack.c.l.b16 %v1243
    %v1406 = vunpack.c.h.b16 %v1243
    %v1407 = vunpack.c.l.b16 %v1244
    %v1408 = vunpack.c.h.b16 %v1244
    %v1409 = vunpack.c.l.b16 %v1245
    %v1410 = vunpack.c.h.b16 %v1245
    %v1411 = vunpack.c.l.b16 %v1246
    %v1412 = vunpack.c.h.b16 %v1246
    %v1413 = vunpack.c.l.b16 %v1247
    %v1414 = vunpack.c.h.b16 %v1247
    %v1415 = vunpack.c.l.b16 %v1248
    %v1416 = vunpack.c.h.b16 %v1248
    %v1417 = vunpack.c.l.b16 %v1249
    %v1418 = vunpack.c.h.b16 %v1249
    %v1419 = vunpack.c.l.b16 %v1250
    %v1420 = vunpack.c.h.b16 %v1250
    %v1421 = vunpack.c.l.b16 %v1251
    %v1422 = vunpack.c.h.b16 %v1251
    %v1423 = vunpack.c.l.b16 %v1252
    %v1424 = vunpack.c.h.b16 %v1252
    %v1425 = vunpack.c.l.b16 %v1253
    %v1426 = vunpack.c.h.b16 %v1253
    %v1427 = vunpack.c.l.b16 %v1254
    %v1428 = vunpack.c.h.b16 %v1254
    %v1429 = vunpack.c.l.b16 %v1255
    %v1430 = vunpack.c.h.b16 %v1255
    %v1431 = vunpack.c.l.b16 %v1256
    %v1432 = vunpack.c.h.b16 %v1256
    %v1433 = vunpack.c.l.b16 %v1257
    %v1434 = vunpack.c.h.b16 %v1257
    %v1435 = vunpack.c.l.b16 %v1258
    %v1436 = vunpack.c.h.b16 %v1258
    %v1437 = vunpack.c.l.b16 %v1259
    %v1438 = vunpack.c.h.b16 %v1259
    %v1439 = vunpack.c.l.b16 %v1260
    %v1440 = vunpack.c.h.b16 %v1260
    %v1441 = vunpack.c.l.b16 %v1261
    %v1442 = vunpack.c.h.b16 %v1261
    %v1443 = vunpack.c.l.b16 %v1262
    %v1444 = vunpack.c.h.b16 %v1262
    %v1445 = vunpack.c.l.b16 %v1263
    %v1446 = vunpack.c.h.b16 %v1263
    %v1447 = vunpack.c.l.b16 %v1264
    %v1448 = vunpack.c.h.b16 %v1264
    %v1449 = vunpack.c.l.b16 %v1265
    %v1450 = vunpack.c.h.b16 %v1265
    %v1451 = vunpack.c.l.b16 %v1266
    %v1452 = vunpack.c.h.b16 %v1266
    %v1453 = vunpack.c.l.b16 %v1267
    %v1454 = vunpack.c.h.b16 %v1267
    %v1455 = vunpack.c.l.b16 %v1268
    %v1456 = vunpack.c.h.b16 %v1268
    %v1457 = vunpack.c.l.b16 %v1269
    %v1458 = vunpack.c.h.b16 %v1269
    %v1459 = vunpack.c.l.b16 %v1270
    %v1460 = vunpack.c.h.b16 %v1270
    %v1461 = vunpack.c.l.b16 %v1271
    %v1462 = vunpack.c.h.b16 %v1271
    %v1463 = vunpack.c.l.b16 %v1272
    %v1464 = vunpack.c.h.b16 %v1272
    %v1465 = vunpack.c.l.b16 %v1273
    %v1466 = vunpack.c.h.b16 %v1273
    %v1467 = vunpack.c.l.b16 %v1274
    %v1468 = vunpack.c.h.b16 %v1274
    %v1469 = vunpack.c.l.b16 %v1275
    %v1470 = vunpack.c.h.b16 %v1275
    %v1471 = vunpack.c.l.b16 %v1276
    %v1472 = vunpack.c.h.b16 %v1276
    %v1473 = vunpack.c.l.b16 %v1277
    %v1474 = vunpack.c.h.b16 %v1277
    %v1475 = vunpack.c.l.b16 %v1278
    %v1476 = vunpack.c.h.b16 %v1278
    %v1477 = vunpack.c.l.b16 %v1279
    %v1478 = vunpack.c.h.b16 %v1279
    %v1479 = vunpack.c.l.b16 %v1280
    %v1480 = vunpack.c.h.b16 %v1280
    %v1481 = vunpack.c.l.b16 %v1281
    %v1482 = vunpack.c.h.b16 %v1281
    %v1483 = vunpack.c.l.b16 %v1282
    %v1484 = vunpack.c.h.b16 %v1282
    %v1485 = vpack.c.b16 %v1361, %v1357
    %v1486 = vpack.c.b16 %v1362, %v1358
    %v1487 = vpack.c.b16 %v1363, %v1359
    %v1488 = vpack.c.b16 %v1364, %v1360
    %v1489 = vpack.c.b16 %v1369, %v1365
    %v1490 = vpack.c.b16 %v1370, %v1366
    %v1491 = vpack.c.b16 %v1371, %v1367
    %v1492 = vpack.c.b16 %v1372, %v1368
    %v1493 = vpack.c.b16 %v1377, %v1373
    %v1494 = vpack.c.b16 %v1378, %v1374
    %v1495 = vpack.c.b16 %v1379, %v1375
    %v1496 = vpack.c.b16 %v1380, %v1376
    %v1497 = vpack.c.b16 %v1385, %v1381
    %v1498 = vpack.c.b16 %v1386, %v1382
    %v1499 = vpack.c.b16 %v1387, %v1383
    %v1500 = vpack.c.b16 %v1388, %v1384
    %v1501 = vpack.c.b16 %v1393, %v1389
    %v1502 = vpack.c.b16 %v1394, %v1390
    %v1503 = vpack.c.b16 %v1395, %v1391
    %v1504 = vpack.c.b16 %v1396, %v1392
    %v1505 = vpack.c.b16 %v1401, %v1397
    %v1506 = vpack.c.b16 %v1402, %v1398
    %v1507 = vpack.c.b16 %v1403, %v1399
    %v1508 = vpack.c.b16 %v1404, %v1400
    %v1509 = vpack.c.b16 %v1409, %v1405
    %v1510 = vpack.c.b16 %v1410, %v1406
    %v1511 = vpack.c.b16 %v1411, %v1407
    %v1512 = vpack.c.b16 %v1412, %v1408
    %v1513 = vpack.c.b16 %v1417, %v1413
    %v1514 = vpack.c.b16 %v1418, %v1414
    %v1515 = vpack.c.b16 %v1419, %v1415
    %v1516 = vpack.c.b16 %v1420, %v1416
    %v1517 = vpack.c.b16 %v1425, %v1421
    %v1518 = vpack.c.b16 %v1426, %v1422
    %v1519 = vpack.c.b16 %v1427, %v1423
    %v1520 = vpack.c.b16 %v1428, %v1424
    %v1521 = vpack.c.b16 %v1433, %v1429
    %v1522 = vpack.c.b16 %v1434, %v1430
    %v1523 = vpack.c.b16 %v1435, %v1431
    %v1524 = vpack.c.b16 %v1436, %v1432
    %v1525 = vpack.c.b16 %v1441, %v1437
    %v1526 = vpack.c.b16 %v1442, %v1438
    %v1527 = vpack.c.b16 %v1443, %v1439
    %v1528 = vpack.c.b16 %v1444, %v1440
    %v1529 = vpack.c.b16 %v1449, %v1445
    %v1530 = vpack.c.b16 %v1450, %v1446
    %v1531 = vpack.c.b16 %v1451, %v1447
    %v1532 = vpack.c.b16 %v1452, %v1448
    %v1533 = vpack.c.b16 %v1457, %v1453
    %v1534 = vpack.c.b16 %v1458, %v1454
    %v1535 = vpack.c.b16 %v1459, %v1455
    %v1536 = vpack.c.b16 %v1460, %v1456
    %v1537 = vpack.c.b16 %v1465, %v1461
    %v1538 = vpack.c.b16 %v1466, %v1462
    %v1539 = vpack.c.b16 %v1467, %v1463
    %v1540 = vpack.c.b16 %v1468, %v1464
    %v1541 = vpack.c.b16 %v1473, %v1469
    %v1542 = vpack.c.b16 %v1474, %v1470
    %v1543 = vpack.c.b16 %v1475, %v1471
    %v1544 = vpack.c.b16 %v1476, %v1472
    %v1545 = vpack.c.b16 %v1481, %v1477
    %v1546 = vpack.c.b16 %v1482, %v1478
    %v1547 = vpack.c.b16 %v1483, %v1479
    %v1548 = vpack.c.b16 %v1484, %v1480
    %1613 = vmatpush.bf16.msra.mxu0 %v1513
    %1614 = vmatpush.bf16.msra.mxu0 %v1509
    %1615 = vmatpush.bf16.msra.mxu0 %v1505
    %1616 = vmatpush.bf16.msra.mxu0 %v1501
    %1617 = vmatpush.bf16.msra.mxu0 %v1497
    %1618 = vmatpush.bf16.msra.mxu0 %v1493
    %1619 = vmatpush.bf16.msra.mxu0 %v1489
    %1620 = vmatpush.bf16.msra.mxu0 %v1485
    %1621 = vmatmul.bf16.gmra.mxu0 %v1213
    %v1622 = vpop.f32.mrf.mxu0
    %v1623 = vadd.f32 %v1285, %v1622
    %v1624 = vpop.f32.mrf.mxu0
    %1625 = vdwg.mxu0
    %1626 = vmatpush.bf16.msra.mxu0 %v1545
    %1627 = vmatpush.bf16.msra.mxu0 %v1541
    %1628 = vmatpush.bf16.msra.mxu0 %v1537
    %1629 = vmatpush.bf16.msra.mxu0 %v1533
    %1630 = vmatpush.bf16.msra.mxu0 %v1529
    %1631 = vmatpush.bf16.msra.mxu0 %v1525
    %1632 = vmatpush.bf16.msra.mxu0 %v1521
    %1633 = vmatpush.bf16.msra.mxu0 %v1517
    %1634 = vmatmul.bf16.gmra.mxu0 %v1216
    %v1635 = vpop.f32.mrf.mxu0
    %v1636 = vadd.f32 %v1623, %v1635
    %v1637 = vpop.f32.mrf.mxu0
    %1638 = vdwg.mxu0
    %1639 = vmatpush.bf16.msra.mxu0 %v1514
    %1640 = vmatpush.bf16.msra.mxu0 %v1510
    %1641 = vmatpush.bf16.msra.mxu0 %v1506
    %1642 = vmatpush.bf16.msra.mxu0 %v1502
    %1643 = vmatpush.bf16.msra.mxu0 %v1498
    %1644 = vmatpush.bf16.msra.mxu0 %v1494
    %1645 = vmatpush.bf16.msra.mxu0 %v1490
    %1646 = vmatpush.bf16.msra.mxu0 %v1486
    %1647 = vmatmul.bf16.gmra.mxu0 %v1213
    %v1648 = vpop.f32.mrf.mxu0
    %v1649 = vadd.f32 %v1286, %v1648
    %v1650 = vpop.f32.mrf.mxu0
    %1651 = vdwg.mxu0
    %1652 = vmatpush.bf16.msra.mxu0 %v1546
    %1653 = vmatpush.bf16.msra.mxu0 %v1542
    %1654 = vmatpush.bf16.msra.mxu0 %v1538
    %1655 = vmatpush.bf16.msra.mxu0 %v1534
    %1656 = vmatpush.bf16.msra.mxu0 %v1530
    %1657 = vmatpush.bf16.msra.mxu0 %v1526
    %1658 = vmatpush.bf16.msra.mxu0 %v1522
    %1659 = vmatpush.bf16.msra.mxu0 %v1518
    %1660 = vmatmul.bf16.gmra.mxu0 %v1216
    %v1661 = vpop.f32.mrf.mxu0
    %v1662 = vadd.f32 %v1649, %v1661
    %v1663 = vpop.f32.mrf.mxu0
    %1664 = vdwg.mxu0
    %1665 = vmatpush.bf16.msra.mxu0 %v1515
    %1666 = vmatpush.bf16.msra.mxu0 %v1511
    %1667 = vmatpush.bf16.msra.mxu0 %v1507
    %1668 = vmatpush.bf16.msra.mxu0 %v1503
    %1669 = vmatpush.bf16.msra.mxu0 %v1499
    %1670 = vmatpush.bf16.msra.mxu0 %v1495
    %1671 = vmatpush.bf16.msra.mxu0 %v1491
    %1672 = vmatpush.bf16.msra.mxu0 %v1487
    %1673 = vmatmul.bf16.gmra.mxu0 %v1213
    %v1674 = vpop.f32.mrf.mxu0
    %v1675 = vadd.f32 %v1287, %v1674
    %v1676 = vpop.f32.mrf.mxu0
    %1677 = vdwg.mxu0
    %1678 = vmatpush.bf16.msra.mxu0 %v1547
    %1679 = vmatpush.bf16.msra.mxu0 %v1543
    %1680 = vmatpush.bf16.msra.mxu0 %v1539
    %1681 = vmatpush.bf16.msra.mxu0 %v1535
    %1682 = vmatpush.bf16.msra.mxu0 %v1531
    %1683 = vmatpush.bf16.msra.mxu0 %v1527
    %1684 = vmatpush.bf16.msra.mxu0 %v1523
    %1685 = vmatpush.bf16.msra.mxu0 %v1519
    %1686 = vmatmul.bf16.gmra.mxu0 %v1216
    %v1687 = vpop.f32.mrf.mxu0
    %v1688 = vadd.f32 %v1675, %v1687
    %v1689 = vpop.f32.mrf.mxu0
    %1690 = vdwg.mxu0
    %1691 = vmatpush.bf16.msra.mxu0 %v1516
    %1692 = vmatpush.bf16.msra.mxu0 %v1512
    %1693 = vmatpush.bf16.msra.mxu0 %v1508
    %1694 = vmatpush.bf16.msra.mxu0 %v1504
    %1695 = vmatpush.bf16.msra.mxu0 %v1500
    %1696 = vmatpush.bf16.msra.mxu0 %v1496
    %1697 = vmatpush.bf16.msra.mxu0 %v1492
    %1698 = vmatpush.bf16.msra.mxu0 %v1488
    %1699 = vmatmul.bf16.gmra.mxu0 %v1213
    %v1700 = vpop.f32.mrf.mxu0
    %v1701 = vadd.f32 %v1288, %v1700
    %v1702 = vpop.f32.mrf.mxu0
    %1703 = vdwg.mxu0
    %1704 = vmatpush.bf16.msra.mxu0 %v1548
    %1705 = vmatpush.bf16.msra.mxu0 %v1544
    %1706 = vmatpush.bf16.msra.mxu0 %v1540
    %1707 = vmatpush.bf16.msra.mxu0 %v1536
    %1708 = vmatpush.bf16.msra.mxu0 %v1532
    %1709 = vmatpush.bf16.msra.mxu0 %v1528
    %1710 = vmatpush.bf16.msra.mxu0 %v1524
    %1711 = vmatpush.bf16.msra.mxu0 %v1520
    %1712 = vmatmul.bf16.gmra.mxu0 %v1216
    %v1713 = vpop.f32.mrf.mxu0
    %v1714 = vadd.f32 %v1701, %v1713
    %v1715 = vpop.f32.mrf.mxu0
    %1716 = vdwg.mxu0
    %v1717 = vxor.u32 %v1636, 2147483648
    %v1718 = vmul.f32 %v1717, 1.442695
    %v1719 = vpow.pop %v1718
    %v1720 = vadd.f32 %v1719, 1.0
    %v1721 = vrcp.pop %v1720
    %v1722 = vmul.f32 %v1720, %v1721
    %v1723 = vsub.f32 1.0, %v1722
    %v1724 = vmul.f32 %v1721, %v1723
    %v1725 = vadd.f32 %v1721, %v1724
    %vm1726 = vweird.f32 %v1720
    %vm1727 = vweird.f32 %v1721
    %vm1728 = vmor %vm1726, %vm1727
    %v1729 = vsel %vm1728, %v1721, %v1725
    %v1730 = vand.u32 2147483647, %v1720
    %vm1731 = vcmp.eq.f32.partialorder %v1730, 8.507059e+37
    %v1732 = vand.u32 %v1720, 2147483648
    %v1733 = vor.u32 1.1754944e-38, %v1732
    %v1734 = vsel %vm1731, %v1733, %v1729
    %v1735 = vmul.f32 1.0, %v1734
    %v1736 = vxor.u32 %v1662, 2147483648
    %v1737 = vmul.f32 %v1736, 1.442695
    %v1738 = vpow.pop %v1737
    %v1739 = vadd.f32 %v1738, 1.0
    %v1740 = vrcp.pop %v1739
    %v1741 = vmul.f32 %v1739, %v1740
    %v1742 = vsub.f32 1.0, %v1741
    %v1743 = vmul.f32 %v1740, %v1742
    %v1744 = vadd.f32 %v1740, %v1743
    %vm1745 = vweird.f32 %v1739
    %vm1746 = vweird.f32 %v1740
    %vm1747 = vmor %vm1745, %vm1746
    %v1748 = vsel %vm1747, %v1740, %v1744
    %v1749 = vand.u32 2147483647, %v1739
    %vm1750 = vcmp.eq.f32.partialorder %v1749, 8.507059e+37
    %v1751 = vand.u32 %v1739, 2147483648
    %v1752 = vor.u32 1.1754944e-38, %v1751
    %v1753 = vsel %vm1750, %v1752, %v1748
    %v1754 = vmul.f32 1.0, %v1753
    %v1755 = vtanh.pop %v1688
    %v1756 = vxor.u32 %v1714, 2147483648
    %v1757 = vmul.f32 %v1756, 1.442695
    %v1758 = vpow.pop %v1757
    %v1759 = vadd.f32 %v1758, 1.0
    %v1760 = vrcp.pop %v1759
    %v1761 = vmul.f32 %v1759, %v1760
    %v1762 = vsub.f32 1.0, %v1761
    %v1763 = vmul.f32 %v1760, %v1762
    %v1764 = vadd.f32 %v1760, %v1763
    %vm1765 = vweird.f32 %v1759
    %vm1766 = vweird.f32 %v1760
    %vm1767 = vmor %vm1765, %vm1766
    %v1768 = vsel %vm1767, %v1760, %v1764
    %v1769 = vand.u32 2147483647, %v1759
    %vm1770 = vcmp.eq.f32.partialorder %v1769, 8.507059e+37
    %v1771 = vand.u32 %v1759, 2147483648
    %v1772 = vor.u32 1.1754944e-38, %v1771
    %v1773 = vsel %vm1770, %v1772, %v1768
    %v1774 = vmul.f32 1.0, %v1773
    %v1775 = vmul.f32 %v1754, %v1218
    %v1776 = vmul.f32 %v1735, %v1755
    %v1777 = vadd.f32 %v1775, %v1776
    %v1778 = vtanh.pop %v1777
    %v1779 = vmul.f32 %v1774, %v1778
    %1780 = vst [vmem:[%s9] sm:$0xff] %v645
    %s1781 = scalar_lea.vmem %s9, 8
    %1782 = vst [vmem:[%s1781] sm:$0xff] %v1212
    %s1783 = scalar_lea.vmem %s9, 16
    %1784 = vst [vmem:[%s1783] sm:$0xff] %v1779
    %1785 = vst [vmem:[%s10] sm:$0xff] %v643
    %s1786 = scalar_lea.vmem %s10, 8
    %1787 = vst [vmem:[%s1786] sm:$0xff] %v1210
    %s1788 = scalar_lea.vmem %s10, 16
    %1789 = vst [vmem:[%s1788] sm:$0xff] %v1777
    // Predicated region
    $region50: #{generator_forward.2} parent=1 // pred_check
      _
    $region51: #{generator_forward.2} parent=1 // pred_check_branch
      %1791 = sbr.rel (0) target = $region53
    $region52: #{generator_forward.2} parent=1 // pred_region
      _
    $region53: #{generator_forward.2} parent=1 // pred_fallthru
      _
    // Predicated region
    $region54: #{generator_forward.2} parent=1 // pred_check
      _
    $region55: #{generator_forward.2} parent=1 // pred_check_branch
      %1793 = sbr.rel (0) target = $region57
    $region56: #{generator_forward.2} parent=1 // pred_region
      _
    $region57: #{generator_forward.2} parent=1 // pred_fallthru
      _
    // Predicated region
    $region58: #{generator_forward.2} parent=1 // pred_check
      _
    $region59: #{generator_forward.2} parent=1 // pred_check_branch
      %1795 = sbr.rel (0) target = $region61
    $region60: #{generator_forward.2} parent=1 // pred_region
      _
    $region61: #{generator_forward.2} parent=1 // pred_fallthru
      _
    // Predicated region
    $region62: #{generator_forward.2} parent=1 // pred_check
      _
    $region63: #{generator_forward.2} parent=1 // pred_check_branch
      %1797 = sbr.rel (0) target = $region65
    $region64: #{generator_forward.2} parent=1 // pred_region
      _
    $region65: #{generator_forward.2} parent=1 // pred_fallthru
      _
    %1798 = vsyncpa [#allocation3], 1
    %1799 = vsyncpa [#allocation5], 1

</llo_original>
